<compile_context>
chip_gen: v7x
topology: tpu7x:2x2x1
jax: 0.10.0
libtpu: 0.0.40
codegen_flags: <defaults>
</compile_context>

<pallas_src>
import functools

import jax
import jax.numpy as jnp
from jax.experimental import pallas as pl
from jax.experimental.pallas import tpu as pltpu

BN_EPS = 1e-5
LANE = 128


def _round_up(n, m):
    return (n + m - 1) // m * m


def _leaky_relu(y):
    # slope 0.2 < 1  =>  LeakyReLU(y) == max(y, 0.2 * y)
    return jnp.maximum(y, 0.2 * y)


def _softplus(x):
    # numerically-stable softplus
    return jnp.maximum(x, 0.0) + jnp.log1p(jnp.exp(-jnp.abs(x)))


def vae_encoder_kernel(x_ref, eps_ref,
                       w1_ref, b1_ref, w2_ref, b2_ref, wh_ref, bh_ref,
                       out_ref, *, lp):
    """One batch tile: 2x (BN-folded Linear -> LeakyReLU) -> fused mu/logvar head.

    Matmuls: bf16 operands, f32 accumulation (native MXU path). Epilogue f32.
    Output: single lane-dense block, cols [0:lp)=z, [lp:2lp)=mu, [2lp:3lp)=logvar.
    """
    bf16 = jnp.bfloat16
    x = x_ref[...]                                  # already bf16

    # --- encoder block 1: (BN-folded) Linear -> LeakyReLU(0.2) ---
    # TODO(synk): nn.Dropout(0.2) is identity in eval mode; training-mode dropout not modeled.
    h1 = jnp.dot(x, w1_ref[...], preferred_element_type=jnp.float32) + b1_ref[...]
    h1 = _leaky_relu(h1)

    # --- encoder block 2 ---
    h2 = jnp.dot(h1.astype(bf16), w2_ref[...],
                 preferred_element_type=jnp.float32) + b2_ref[...]
    h2 = _leaky_relu(h2)

    # --- fused heads: cols [0:lp) = mu, [lp:2lp) = logvar pre-activation ---
    heads = jnp.dot(h2.astype(bf16), wh_ref[...],
                    preferred_element_type=jnp.float32) + bh_ref[...]
    mu = heads[:, :lp]
    lv = jnp.clip(_softplus(heads[:, lp:]), 1e-4, 10.0)

    # reparameterize: z = mu + eps * (exp(0.5*logvar) + 1e-6)
    std = jnp.exp(0.5 * lv) + 1e-6
    out_ref[:, 0 * lp:1 * lp] = mu + eps_ref[...] * std
    out_ref[:, 1 * lp:2 * lp] = mu
    out_ref[:, 2 * lp:3 * lp] = lv


def _fold_and_pad_params(params, input_dim, hidden_dims, latent_dim):
    """Fold eval-mode BN into the Linears; zero-pad to lane-dense dims; bf16 weights."""
    h1, h2 = hidden_dims
    dp = _round_up(input_dim, LANE)
    h1p = _round_up(h1, LANE)
    h2p = _round_up(h2, LANE)
    lp = _round_up(latent_dim, LANE)

    def fold(w, b, g, beta, rm, rv):
        s = g * jax.lax.rsqrt(rv + BN_EPS)          # (1, h)
        return w * s, (b - rm) * s + beta

    w1f, b1f = fold(params["w1"], params["b1"], params["g1"], params["beta1"],
                    params["rm1"], params["rv1"])
    w2f, b2f = fold(params["w2"], params["b2"], params["g2"], params["beta2"],
                    params["rm2"], params["rv2"])

    def pad2(a, r, c, dtype):
        return jnp.zeros((r, c), dtype).at[:a.shape[0], :a.shape[1]].set(a.astype(dtype))

    # Weights as bf16 (MXU-native operands); biases stay f32 (epilogue math).
    w1p = pad2(w1f, dp, h1p, jnp.bfloat16)
    b1p = pad2(b1f, 1, h1p, jnp.float32)
    w2p = pad2(w2f, h1p, h2p, jnp.bfloat16)
    b2p = pad2(b2f, 1, h2p, jnp.float32)

    # Fused head weight/bias: mu in cols [0:L), logvar in cols [lp:lp+L).
    wh = jnp.zeros((h2p, 2 * lp), jnp.bfloat16)
    wh = wh.at[:h2, :latent_dim].set(params["wmu"].astype(jnp.bfloat16))
    wh = wh.at[:h2, lp:lp + latent_dim].set(params["wlv"].astype(jnp.bfloat16))
    bh = jnp.zeros((1, 2 * lp), jnp.float32)
    bh = bh.at[:, :latent_dim].set(params["bmu"])
    bh = bh.at[:, lp:lp + latent_dim].set(params["blv"])

    return (w1p, b1p, w2p, b2p, wh, bh), (dp, h1p, h2p, lp)


def vae_encoder_forward(x, params, eps, *, tb=512):
    B, input_dim = x.shape
    if input_dim != params["w1"].shape[0]:
        raise ValueError(
            f"Expected input with dim {params['w1'].shape[0]}, but got {input_dim}")
    latent = params["wmu"].shape[1]
    hidden = (params["w1"].shape[1], params["w2"].shape[1])

    (w1p, b1p, w2p, b2p, wh, bh), (dp, h1p, h2p, lp) = _fold_and_pad_params(
        params, input_dim, hidden, latent)

    # --- batch tiling: lane/sublane-aligned; prefer >= 2 grid steps (v7x: 2 TCs) ---
    bp128 = _round_up(B, LANE)
    tb_eff = min(_round_up(tb, LANE), bp128)
    if bp128 // tb_eff < 2 and bp128 >= 2 * LANE:
        tb_eff = _round_up(bp128 // 2, LANE)
    bp = _round_up(bp128, tb_eff)
    grid = (bp // tb_eff,)

    # Inputs: x as bf16 (matmul operand, halves HBM traffic), eps f32 (epilogue).
    xp = jnp.zeros((bp, dp), jnp.bfloat16).at[:B, :input_dim].set(
        x.astype(jnp.bfloat16))
    epsp = jnp.zeros((bp, lp), jnp.float32).at[:B, :latent].set(eps)

    # TODO(synk): for very large input_dim the resident-weight footprint can exceed
    # v7x's 64 MiB VMEM/TC; that case needs a K-tiled (dp-axis, "arbitrary") grid
    # with an f32 accumulator instead of fully VMEM-resident weights.
    weight_bytes = (2 * (dp * h1p + h1p * h2p + h2p * 2 * lp)      # bf16 weights
                    + 4 * (h1p + h2p + 2 * lp))                    # f32 biases

    # Advisory cost estimate for the XLA scheduler.
    flops = 2 * bp * (dp * h1p + h1p * h2p + h2p * 2 * lp)
    transcendentals = 3 * bp * lp
    bytes_accessed = (2 * bp * dp + 4 * bp * lp      # inputs
                      + weight_bytes                 # weights / biases
                      + 4 * bp * 3 * lp)             # fused output
    cost = pl.CostEstimate(flops=flops, transcendentals=transcendentals,
                           bytes_accessed=bytes_accessed)

    out_shape = jax.ShapeDtypeStruct((bp, 3 * lp), jnp.float32)

    def run(single_buffer_weights):
        def batch_spec(cols):
            return pl.BlockSpec((tb_eff, cols), lambda i: (i, 0))

        def const_spec(shape):
            if single_buffer_weights:
                # Constant index_map -> weights are VMEM-resident; no point
                # paying for a second (double) buffer.
                return pl.BlockSpec(shape, lambda i: (0, 0),
                                    pipeline_mode=pl.Buffered(1))
            return pl.BlockSpec(shape, lambda i: (0, 0))

        in_specs = [
            batch_spec(dp),                # x tile (bf16, double-buffered)
            batch_spec(lp),                # eps tile (f32)
            const_spec((dp, h1p)),         # w1 (bf16, VMEM-resident)
            const_spec((1, h1p)),          # b1
            const_spec((h1p, h2p)),        # w2
            const_spec((1, h2p)),          # b2
            const_spec((h2p, 2 * lp)),     # fused head weight
            const_spec((1, 2 * lp)),       # fused head bias
        ]
        out_specs = batch_spec(3 * lp)

        # VMEM budget: resident weights (+copy if double-buffered) +
        # double-buffered activation/output tiles + f32/bf16 temporaries.
        wbuf = 1 if single_buffer_weights else 2
        tile_bytes = tb_eff * (2 * dp + 4 * lp + 4 * 3 * lp)
        tmp_bytes = 6 * tb_eff * (h1p + h2p + 2 * lp)
        needed = wbuf * weight_bytes + 2 * tile_bytes + tmp_bytes
        vmem_limit = int(min(max(needed + (4 << 20), 16 << 20), 48 << 20))

        kernel = functools.partial(vae_encoder_kernel, lp=lp)
        return pl.pallas_call(
            kernel,
            out_shape=out_shape,
            grid=grid,
            in_specs=in_specs,
            out_specs=out_specs,
            compiler_params=pltpu.CompilerParams(
                dimension_semantics=("parallel",),
                vmem_limit_bytes=vmem_limit),
            cost_estimate=cost,
        )(xp, epsp, w1p, b1p, w2p, b2p, wh, bh)

    try:
        out = run(True)
    except Exception:
        # Fallback for JAX versions without BlockSpec(pipeline_mode=...).
        out = run(False)

    z = out[:B, 0 * lp:0 * lp + latent]
    mu = out[:B, 1 * lp:1 * lp + latent]
    lv = out[:B, 2 * lp:2 * lp + latent]
    return z, mu, lv


def init_params(key, input_dim, hidden_dims, latent_dim):
    """Deterministic synthetic parameter init (weights stored as (in, out))."""
    ks = jax.random.split(key, 8)
    h1, h2 = hidden_dims

    def lin(k, fan_in, fan_out):
        scale = 1.0 / jnp.sqrt(jnp.float32(fan_in))
        w = jax.random.uniform(k, (fan_in, fan_out), jnp.float32, -scale, scale)
        b = jnp.zeros((1, fan_out), jnp.float32)
        return w, b

    w1, b1 = lin(ks[0], input_dim, h1)
    w2, b2 = lin(ks[1], h1, h2)
    wmu, bmu = lin(ks[2], h2, latent_dim)
    wlv, blv = lin(ks[3], h2, latent_dim)

    return dict(
        w1=w1, b1=b1,
        g1=jnp.ones((1, h1), jnp.float32), beta1=jnp.zeros((1, h1), jnp.float32),
        rm1=jnp.zeros((1, h1), jnp.float32), rv1=jnp.ones((1, h1), jnp.float32),
        w2=w2, b2=b2,
        g2=jnp.ones((1, h2), jnp.float32), beta2=jnp.zeros((1, h2), jnp.float32),
        rm2=jnp.zeros((1, h2), jnp.float32), rv2=jnp.ones((1, h2), jnp.float32),
        wmu=wmu, bmu=bmu, wlv=wlv, blv=blv,
    )


def reference_forward(x, p, eps):
    """Plain-JAX f32 reference (un-folded, un-padded) matching the module."""
    def bn_leaky(h, g, be, rm, rv):
        y = (h - rm) / jnp.sqrt(rv + BN_EPS) * g + be
        return jnp.where(y > 0, y, 0.2 * y)

    h1 = bn_leaky(x @ p["w1"] + p["b1"], p["g1"], p["beta1"], p["rm1"], p["rv1"])
    h2 = bn_leaky(h1 @ p["w2"] + p["b2"], p["g2"], p["beta2"], p["rm2"], p["rv2"])
    mu = h2 @ p["wmu"] + p["bmu"]
    lv = jnp.clip(jax.nn.softplus(h2 @ p["wlv"] + p["blv"]), 1e-4, 10.0)
    z = mu + eps * (jnp.exp(0.5 * lv) + 1e-6)
    return z, mu, lv


def reference_forward_bf16(x, p, eps):
    """Reference that mirrors the kernel's bf16-operand / f32-accumulate matmuls."""
    bf16 = jnp.bfloat16

    def fold(w, b, g, beta, rm, rv):
        s = g * jax.lax.rsqrt(rv + BN_EPS)
        return w * s, (b - rm) * s + beta

    w1, b1 = fold(p["w1"], p["b1"], p["g1"], p["beta1"], p["rm1"], p["rv1"])
    w2, b2 = fold(p["w2"], p["b2"], p["g2"], p["beta2"], p["rm2"], p["rv2"])

    def mm(a, w):
        return jnp.dot(a.astype(bf16), w.astype(bf16),
                       preferred_element_type=jnp.float32)

    h1 = _leaky_relu(mm(x, w1) + b1)
    h2 = _leaky_relu(mm(h1, w2) + b2)
    mu = mm(h2, p["wmu"]) + p["bmu"]
    lv = jnp.clip(jax.nn.softplus(mm(h2, p["wlv"]) + p["blv"]), 1e-4, 10.0)
    z = mu + eps * (jnp.exp(0.5 * lv) + 1e-6)
    return z, mu, lv


if __name__ == "__main__":
    # Small shapes consistent with the module (defaults [1024, 512]/128 scaled down).
    B, INPUT_DIM, LATENT = 8, 64, 32
    HIDDEN = [128, 64]

    key = jax.random.PRNGKey(0)
    kx, keps, kp = jax.random.split(key, 3)

    x = jax.random.normal(kx, (B, INPUT_DIM), jnp.float32)
    eps = jax.random.normal(keps, (B, LATENT), jnp.float32)  # deterministic "randn_like"
    params = init_params(kp, INPUT_DIM, HIDDEN, LATENT)

    z, mu, logvar = vae_encoder_forward(x, params, eps)
    jax.block_until_ready((z, mu, logvar))

    # Tight check vs. a reference using the same bf16-operand / f32-accum matmuls.
    z_m, mu_m, lv_m = reference_forward_bf16(x, params, eps)
    assert jnp.allclose(z, z_m, atol=2e-3, rtol=2e-3)
    assert jnp.allclose(mu, mu_m, atol=2e-3, rtol=2e-3)
    assert jnp.allclose(logvar, lv_m, atol=2e-3, rtol=2e-3)

    # Looser check vs. the pure-f32 module semantics (bf16 operand rounding).
    z_r, mu_r, lv_r = reference_forward(x, params, eps)
    assert jnp.allclose(z, z_r, atol=5e-2, rtol=5e-2)
    assert jnp.allclose(mu, mu_r, atol=5e-2, rtol=5e-2)
    assert jnp.allclose(logvar, lv_r, atol=5e-2, rtol=5e-2)

    print("KERNEL_OK")
</pallas_src>

<mosaic_0001>
module attributes {stable_mosaic.version = 11 : i64} {
  func.func @vae_encoder_kernel(%arg0: i32, %arg1: memref<128x128xbf16, #tpu.memory_space<vmem>>, %arg2: memref<128x128xf32, #tpu.memory_space<vmem>>, %arg3: memref<128x128xbf16, #tpu.memory_space<vmem>>, %arg4: memref<1x128xf32, #tpu.memory_space<vmem>>, %arg5: memref<128x128xbf16, #tpu.memory_space<vmem>>, %arg6: memref<1x128xf32, #tpu.memory_space<vmem>>, %arg7: memref<128x256xbf16, #tpu.memory_space<vmem>>, %arg8: memref<1x256xf32, #tpu.memory_space<vmem>>, %arg9: memref<128x384xf32, #tpu.memory_space<vmem>>) attributes {dimension_semantics = [#tpu.dimension_semantics<parallel>], iteration_bounds = array<i64: 1>, scalar_prefetch = 0 : i64, scratch_operands = 0 : i64, tpu.core_type = #tpu.core_type<tc>, window_params = [{transform_indices = @transform_0, window_bounds = array<i64: 128, 128>}, {transform_indices = @transform_1, window_bounds = array<i64: 128, 128>}, {pipeline_mode = #tpu.pipeline_mode<synchronous>, transform_indices = @transform_2, window_bounds = array<i64: 128, 128>}, {pipeline_mode = #tpu.pipeline_mode<synchronous>, transform_indices = @transform_3, window_bounds = array<i64: 1, 128>}, {pipeline_mode = #tpu.pipeline_mode<synchronous>, transform_indices = @transform_4, window_bounds = array<i64: 128, 128>}, {pipeline_mode = #tpu.pipeline_mode<synchronous>, transform_indices = @transform_5, window_bounds = array<i64: 1, 128>}, {pipeline_mode = #tpu.pipeline_mode<synchronous>, transform_indices = @transform_6, window_bounds = array<i64: 128, 256>}, {pipeline_mode = #tpu.pipeline_mode<synchronous>, transform_indices = @transform_7, window_bounds = array<i64: 1, 256>}, {transform_indices = @transform_8, window_bounds = array<i64: 128, 384>}]} {
    %c0 = arith.constant 0 : index
    %c0_0 = arith.constant 0 : index
    %0 = vector.load %arg1[%c0, %c0_0] : memref<128x128xbf16, #tpu.memory_space<vmem>>, vector<128x128xbf16>
    %c0_1 = arith.constant 0 : index
    %c0_2 = arith.constant 0 : index
    %1 = vector.load %arg3[%c0_1, %c0_2] : memref<128x128xbf16, #tpu.memory_space<vmem>>, vector<128x128xbf16>
    %cst = arith.constant dense<0.000000e+00> : vector<128x128xf32>
    %2 = tpu.matmul %0, %1, %cst {dimension_numbers = #tpu.dot_dimension_numbers<[1], [0], [0], [1], [0, 0, 1, 1], [], []>} : vector<128x128xbf16>, vector<128x128xbf16>, vector<128x128xf32> -> vector<128x128xf32>
    %c0_3 = arith.constant 0 : index
    %c0_4 = arith.constant 0 : index
    %3 = vector.load %arg4[%c0_3, %c0_4] : memref<1x128xf32, #tpu.memory_space<vmem>>, vector<1x128xf32>
    %4 = vector.broadcast %3 : vector<1x128xf32> to vector<128x128xf32>
    %5 = arith.addf %2, %4 : vector<128x128xf32>
    %cst_5 = arith.constant 2.000000e-01 : f32
    %6 = vector.broadcast %cst_5 : f32 to vector<128x128xf32>
    %7 = arith.mulf %6, %5 : vector<128x128xf32>
    %8 = arith.maximumf %5, %7 : vector<128x128xf32>
    %9 = arith.truncf %8 : vector<128x128xf32> to vector<128x128xbf16>
    %c0_6 = arith.constant 0 : index
    %c0_7 = arith.constant 0 : index
    %10 = vector.load %arg5[%c0_6, %c0_7] : memref<128x128xbf16, #tpu.memory_space<vmem>>, vector<128x128xbf16>
    %cst_8 = arith.constant dense<0.000000e+00> : vector<128x128xf32>
    %11 = tpu.matmul %9, %10, %cst_8 {dimension_numbers = #tpu.dot_dimension_numbers<[1], [0], [0], [1], [0, 0, 1, 1], [], []>} : vector<128x128xbf16>, vector<128x128xbf16>, vector<128x128xf32> -> vector<128x128xf32>
    %c0_9 = arith.constant 0 : index
    %c0_10 = arith.constant 0 : index
    %12 = vector.load %arg6[%c0_9, %c0_10] : memref<1x128xf32, #tpu.memory_space<vmem>>, vector<1x128xf32>
    %13 = vector.broadcast %12 : vector<1x128xf32> to vector<128x128xf32>
    %14 = arith.addf %11, %13 : vector<128x128xf32>
    %cst_11 = arith.constant 2.000000e-01 : f32
    %15 = vector.broadcast %cst_11 : f32 to vector<128x128xf32>
    %16 = arith.mulf %15, %14 : vector<128x128xf32>
    %17 = arith.maximumf %14, %16 : vector<128x128xf32>
    %18 = arith.truncf %17 : vector<128x128xf32> to vector<128x128xbf16>
    %c0_12 = arith.constant 0 : index
    %c0_13 = arith.constant 0 : index
    %19 = vector.load %arg7[%c0_12, %c0_13] : memref<128x256xbf16, #tpu.memory_space<vmem>>, vector<128x256xbf16>
    %cst_14 = arith.constant dense<0.000000e+00> : vector<128x256xf32>
    %20 = tpu.matmul %18, %19, %cst_14 {dimension_numbers = #tpu.dot_dimension_numbers<[1], [0], [0], [1], [0, 0, 1, 1], [], []>} : vector<128x128xbf16>, vector<128x256xbf16>, vector<128x256xf32> -> vector<128x256xf32>
    %c0_15 = arith.constant 0 : index
    %c0_16 = arith.constant 0 : index
    %21 = vector.load %arg8[%c0_15, %c0_16] : memref<1x256xf32, #tpu.memory_space<vmem>>, vector<1x256xf32>
    %22 = vector.broadcast %21 : vector<1x256xf32> to vector<128x256xf32>
    %23 = arith.addf %20, %22 : vector<128x256xf32>
    %24 = vector.extract_strided_slice %23 {offsets = [0, 0], sizes = [128, 128], strides = [1, 1]} : vector<128x256xf32> to vector<128x128xf32>
    %25 = vector.extract_strided_slice %23 {offsets = [0, 128], sizes = [128, 128], strides = [1, 1]} : vector<128x256xf32> to vector<128x128xf32>
    %cst_17 = arith.constant 0.000000e+00 : f32
    %26 = vector.broadcast %cst_17 : f32 to vector<128x128xf32>
    %27 = arith.maximumf %25, %26 : vector<128x128xf32>
    %28 = math.absf %25 : vector<128x128xf32>
    %cst_18 = arith.constant 0.000000e+00 : f32
    %29 = vector.broadcast %cst_18 : f32 to vector<128x128xf32>
    %30 = arith.subf %29, %28 : vector<128x128xf32>
    %31 = math.exp %30 : vector<128x128xf32>
    %32 = math.log1p %31 : vector<128x128xf32>
    %33 = arith.addf %27, %32 : vector<128x128xf32>
    %cst_19 = arith.constant 9.99999974E-5 : f32
    %cst_20 = arith.constant 1.000000e+01 : f32
    %34 = vector.broadcast %cst_19 : f32 to vector<128x128xf32>
    %35 = arith.maximumf %34, %33 : vector<128x128xf32>
    %36 = vector.broadcast %cst_20 : f32 to vector<128x128xf32>
    %37 = arith.minimumf %36, %35 : vector<128x128xf32>
    %cst_21 = arith.constant 5.000000e-01 : f32
    %38 = vector.broadcast %cst_21 : f32 to vector<128x128xf32>
    %39 = arith.mulf %38, %37 : vector<128x128xf32>
    %40 = math.exp %39 : vector<128x128xf32>
    %cst_22 = arith.constant 9.99999997E-7 : f32
    %41 = vector.broadcast %cst_22 : f32 to vector<128x128xf32>
    %42 = arith.addf %40, %41 : vector<128x128xf32>
    %c0_23 = arith.constant 0 : index
    %c0_24 = arith.constant 0 : index
    %43 = vector.load %arg2[%c0_23, %c0_24] : memref<128x128xf32, #tpu.memory_space<vmem>>, vector<128x128xf32>
    %44 = arith.mulf %43, %42 : vector<128x128xf32>
    %45 = arith.addf %24, %44 : vector<128x128xf32>
    %c0_25 = arith.constant 0 : index
    %c0_26 = arith.constant 0 : index
    %46 = vector.load %arg9[%c0_25, %c0_26] : memref<128x384xf32, #tpu.memory_space<vmem>>, vector<128x128xf32>
    tpu.vector_store %arg9[%c0_25, %c0_26], %45 {strides = array<i32>} : memref<128x384xf32, #tpu.memory_space<vmem>>, vector<128x128xf32>,
    %c0_27 = arith.constant 0 : index
    %c128 = arith.constant 128 : index
    %47 = vector.load %arg9[%c0_27, %c128] : memref<128x384xf32, #tpu.memory_space<vmem>>, vector<128x128xf32>
    tpu.vector_store %arg9[%c0_27, %c128], %24 {strides = array<i32>} : memref<128x384xf32, #tpu.memory_space<vmem>>, vector<128x128xf32>,
    %c0_28 = arith.constant 0 : index
    %c256 = arith.constant 256 : index
    %48 = vector.load %arg9[%c0_28, %c256] : memref<128x384xf32, #tpu.memory_space<vmem>>, vector<128x128xf32>
    tpu.vector_store %arg9[%c0_28, %c256], %37 {strides = array<i32>} : memref<128x384xf32, #tpu.memory_space<vmem>>, vector<128x128xf32>,
    return
  }
  func.func @transform_0(%arg0: i32) -> (i32, i32) {
    %c0_i32 = arith.constant 0 : i32
    %c0_i32_0 = arith.constant 0 : i32
    return %arg0, %c0_i32 : i32, i32
  }
  func.func @transform_1(%arg0: i32) -> (i32, i32) {
    %c0_i32 = arith.constant 0 : i32
    %c0_i32_0 = arith.constant 0 : i32
    return %arg0, %c0_i32 : i32, i32
  }
  func.func @transform_2(%arg0: i32) -> (i32, i32) {
    %c0_i32 = arith.constant 0 : i32
    %c0_i32_0 = arith.constant 0 : i32
    %c0_i32_1 = arith.constant 0 : i32
    return %c0_i32, %c0_i32_0 : i32, i32
  }
  func.func @transform_3(%arg0: i32) -> (i32, i32) {
    %c0_i32 = arith.constant 0 : i32
    %c0_i32_0 = arith.constant 0 : i32
    %c0_i32_1 = arith.constant 0 : i32
    return %c0_i32, %c0_i32_0 : i32, i32
  }
  func.func @transform_4(%arg0: i32) -> (i32, i32) {
    %c0_i32 = arith.constant 0 : i32
    %c0_i32_0 = arith.constant 0 : i32
    %c0_i32_1 = arith.constant 0 : i32
    return %c0_i32, %c0_i32_0 : i32, i32
  }
  func.func @transform_5(%arg0: i32) -> (i32, i32) {
    %c0_i32 = arith.constant 0 : i32
    %c0_i32_0 = arith.constant 0 : i32
    %c0_i32_1 = arith.constant 0 : i32
    return %c0_i32, %c0_i32_0 : i32, i32
  }
  func.func @transform_6(%arg0: i32) -> (i32, i32) {
    %c0_i32 = arith.constant 0 : i32
    %c0_i32_0 = arith.constant 0 : i32
    %c0_i32_1 = arith.constant 0 : i32
    return %c0_i32, %c0_i32_0 : i32, i32
  }
  func.func @transform_7(%arg0: i32) -> (i32, i32) {
    %c0_i32 = arith.constant 0 : i32
    %c0_i32_0 = arith.constant 0 : i32
    %c0_i32_1 = arith.constant 0 : i32
    return %c0_i32, %c0_i32_0 : i32, i32
  }
  func.func @transform_8(%arg0: i32) -> (i32, i32) {
    %c0_i32 = arith.constant 0 : i32
    %c0_i32_0 = arith.constant 0 : i32
    return %arg0, %c0_i32 : i32, i32
  }
}

module attributes {stable_mosaic.version = 11 : i64} {
  func.func @vae_encoder_kernel(%arg0: i32, %arg1: memref<128x128xbf16, #tpu.memory_space<vmem>>, %arg2: memref<128x128xf32, #tpu.memory_space<vmem>>, %arg3: memref<128x128xbf16, #tpu.memory_space<vmem>>, %arg4: memref<1x128xf32, #tpu.memory_space<vmem>>, %arg5: memref<128x128xbf16, #tpu.memory_space<vmem>>, %arg6: memref<1x128xf32, #tpu.memory_space<vmem>>, %arg7: memref<128x256xbf16, #tpu.memory_space<vmem>>, %arg8: memref<1x256xf32, #tpu.memory_space<vmem>>, %arg9: memref<128x384xf32, #tpu.memory_space<vmem>>) attributes {dimension_semantics = [#tpu.dimension_semantics<parallel>], iteration_bounds = array<i64: 1>, scalar_prefetch = 0 : i64, scratch_operands = 0 : i64, tpu.core_type = #tpu.core_type<tc>, window_params = [{transform_indices = @transform_0, window_bounds = array<i64: 128, 128>}, {transform_indices = @transform_1, window_bounds = array<i64: 128, 128>}, {pipeline_mode = #tpu.pipeline_mode<synchronous>, transform_indices = @transform_2, window_bounds = array<i64: 128, 128>}, {pipeline_mode = #tpu.pipeline_mode<synchronous>, transform_indices = @transform_3, window_bounds = array<i64: 1, 128>}, {pipeline_mode = #tpu.pipeline_mode<synchronous>, transform_indices = @transform_4, window_bounds = array<i64: 128, 128>}, {pipeline_mode = #tpu.pipeline_mode<synchronous>, transform_indices = @transform_5, window_bounds = array<i64: 1, 128>}, {pipeline_mode = #tpu.pipeline_mode<synchronous>, transform_indices = @transform_6, window_bounds = array<i64: 128, 256>}, {pipeline_mode = #tpu.pipeline_mode<synchronous>, transform_indices = @transform_7, window_bounds = array<i64: 1, 256>}, {transform_indices = @transform_8, window_bounds = array<i64: 128, 384>}]} {
    %c0 = arith.constant 0 : index
    %c0_0 = arith.constant 0 : index
    %0 = vector.load %arg1[%c0, %c0_0] : memref<128x128xbf16, #tpu.memory_space<vmem>>, vector<128x128xbf16>
    %c0_1 = arith.constant 0 : index
    %c0_2 = arith.constant 0 : index
    %1 = vector.load %arg3[%c0_1, %c0_2] : memref<128x128xbf16, #tpu.memory_space<vmem>>, vector<128x128xbf16>
    %cst = arith.constant dense<0.000000e+00> : vector<128x128xf32>
    %2 = tpu.matmul %0, %1, %cst {dimension_numbers = #tpu.dot_dimension_numbers<[1], [0], [0], [1], [0, 0, 1, 1], [], []>} : vector<128x128xbf16>, vector<128x128xbf16>, vector<128x128xf32> -> vector<128x128xf32>
    %c0_3 = arith.constant 0 : index
    %c0_4 = arith.constant 0 : index
    %3 = vector.load %arg4[%c0_3, %c0_4] : memref<1x128xf32, #tpu.memory_space<vmem>>, vector<1x128xf32>
    %4 = vector.broadcast %3 : vector<1x128xf32> to vector<128x128xf32>
    %5 = arith.addf %2, %4 : vector<128x128xf32>
    %cst_5 = arith.constant 2.000000e-01 : f32
    %6 = vector.broadcast %cst_5 : f32 to vector<128x128xf32>
    %7 = arith.mulf %6, %5 : vector<128x128xf32>
    %8 = arith.maximumf %5, %7 : vector<128x128xf32>
    %9 = arith.truncf %8 : vector<128x128xf32> to vector<128x128xbf16>
    %c0_6 = arith.constant 0 : index
    %c0_7 = arith.constant 0 : index
    %10 = vector.load %arg5[%c0_6, %c0_7] : memref<128x128xbf16, #tpu.memory_space<vmem>>, vector<128x128xbf16>
    %cst_8 = arith.constant dense<0.000000e+00> : vector<128x128xf32>
    %11 = tpu.matmul %9, %10, %cst_8 {dimension_numbers = #tpu.dot_dimension_numbers<[1], [0], [0], [1], [0, 0, 1, 1], [], []>} : vector<128x128xbf16>, vector<128x128xbf16>, vector<128x128xf32> -> vector<128x128xf32>
    %c0_9 = arith.constant 0 : index
    %c0_10 = arith.constant 0 : index
    %12 = vector.load %arg6[%c0_9, %c0_10] : memref<1x128xf32, #tpu.memory_space<vmem>>, vector<1x128xf32>
    %13 = vector.broadcast %12 : vector<1x128xf32> to vector<128x128xf32>
    %14 = arith.addf %11, %13 : vector<128x128xf32>
    %cst_11 = arith.constant 2.000000e-01 : f32
    %15 = vector.broadcast %cst_11 : f32 to vector<128x128xf32>
    %16 = arith.mulf %15, %14 : vector<128x128xf32>
    %17 = arith.maximumf %14, %16 : vector<128x128xf32>
    %18 = arith.truncf %17 : vector<128x128xf32> to vector<128x128xbf16>
    %c0_12 = arith.constant 0 : index
    %c0_13 = arith.constant 0 : index
    %19 = vector.load %arg7[%c0_12, %c0_13] : memref<128x256xbf16, #tpu.memory_space<vmem>>, vector<128x256xbf16>
    %cst_14 = arith.constant dense<0.000000e+00> : vector<128x256xf32>
    %20 = tpu.matmul %18, %19, %cst_14 {dimension_numbers = #tpu.dot_dimension_numbers<[1], [0], [0], [1], [0, 0, 1, 1], [], []>} : vector<128x128xbf16>, vector<128x256xbf16>, vector<128x256xf32> -> vector<128x256xf32>
    %c0_15 = arith.constant 0 : index
    %c0_16 = arith.constant 0 : index
    %21 = vector.load %arg8[%c0_15, %c0_16] : memref<1x256xf32, #tpu.memory_space<vmem>>, vector<1x256xf32>
    %22 = vector.broadcast %21 : vector<1x256xf32> to vector<128x256xf32>
    %23 = arith.addf %20, %22 : vector<128x256xf32>
    %24 = vector.extract_strided_slice %23 {offsets = [0, 0], sizes = [128, 128], strides = [1, 1]} : vector<128x256xf32> to vector<128x128xf32>
    %25 = vector.extract_strided_slice %23 {offsets = [0, 128], sizes = [128, 128], strides = [1, 1]} : vector<128x256xf32> to vector<128x128xf32>
    %cst_17 = arith.constant 0.000000e+00 : f32
    %26 = vector.broadcast %cst_17 : f32 to vector<128x128xf32>
    %27 = arith.maximumf %25, %26 : vector<128x128xf32>
    %28 = math.absf %25 : vector<128x128xf32>
    %cst_18 = arith.constant 0.000000e+00 : f32
    %29 = vector.broadcast %cst_18 : f32 to vector<128x128xf32>
    %30 = arith.subf %29, %28 : vector<128x128xf32>
    %31 = math.exp %30 : vector<128x128xf32>
    %32 = math.log1p %31 : vector<128x128xf32>
    %33 = arith.addf %27, %32 : vector<128x128xf32>
    %cst_19 = arith.constant 9.99999974E-5 : f32
    %cst_20 = arith.constant 1.000000e+01 : f32
    %34 = vector.broadcast %cst_19 : f32 to vector<128x128xf32>
    %35 = arith.maximumf %34, %33 : vector<128x128xf32>
    %36 = vector.broadcast %cst_20 : f32 to vector<128x128xf32>
    %37 = arith.minimumf %36, %35 : vector<128x128xf32>
    %cst_21 = arith.constant 5.000000e-01 : f32
    %38 = vector.broadcast %cst_21 : f32 to vector<128x128xf32>
    %39 = arith.mulf %38, %37 : vector<128x128xf32>
    %40 = math.exp %39 : vector<128x128xf32>
    %cst_22 = arith.constant 9.99999997E-7 : f32
    %41 = vector.broadcast %cst_22 : f32 to vector<128x128xf32>
    %42 = arith.addf %40, %41 : vector<128x128xf32>
    %c0_23 = arith.constant 0 : index
    %c0_24 = arith.constant 0 : index
    %43 = vector.load %arg2[%c0_23, %c0_24] : memref<128x128xf32, #tpu.memory_space<vmem>>, vector<128x128xf32>
    %44 = arith.mulf %43, %42 : vector<128x128xf32>
    %45 = arith.addf %24, %44 : vector<128x128xf32>
    %c0_25 = arith.constant 0 : index
    %c0_26 = arith.constant 0 : index
    %46 = vector.load %arg9[%c0_25, %c0_26] : memref<128x384xf32, #tpu.memory_space<vmem>>, vector<128x128xf32>
    tpu.vector_store %arg9[%c0_25, %c0_26], %45 {strides = array<i32>} : memref<128x384xf32, #tpu.memory_space<vmem>>, vector<128x128xf32>,
    %c0_27 = arith.constant 0 : index
    %c128 = arith.constant 128 : index
    %47 = vector.load %arg9[%c0_27, %c128] : memref<128x384xf32, #tpu.memory_space<vmem>>, vector<128x128xf32>
    tpu.vector_store %arg9[%c0_27, %c128], %24 {strides = array<i32>} : memref<128x384xf32, #tpu.memory_space<vmem>>, vector<128x128xf32>,
    %c0_28 = arith.constant 0 : index
    %c256 = arith.constant 256 : index
    %48 = vector.load %arg9[%c0_28, %c256] : memref<128x384xf32, #tpu.memory_space<vmem>>, vector<128x128xf32>
    tpu.vector_store %arg9[%c0_28, %c256], %37 {strides = array<i32>} : memref<128x384xf32, #tpu.memory_space<vmem>>, vector<128x128xf32>,
    return
  }
  func.func @transform_0(%arg0: i32) -> (i32, i32) {
    %c0_i32 = arith.constant 0 : i32
    %c0_i32_0 = arith.constant 0 : i32
    return %arg0, %c0_i32 : i32, i32
  }
  func.func @transform_1(%arg0: i32) -> (i32, i32) {
    %c0_i32 = arith.constant 0 : i32
    %c0_i32_0 = arith.constant 0 : i32
    return %arg0, %c0_i32 : i32, i32
  }
  func.func @transform_2(%arg0: i32) -> (i32, i32) {
    %c0_i32 = arith.constant 0 : i32
    %c0_i32_0 = arith.constant 0 : i32
    %c0_i32_1 = arith.constant 0 : i32
    return %c0_i32, %c0_i32_0 : i32, i32
  }
  func.func @transform_3(%arg0: i32) -> (i32, i32) {
    %c0_i32 = arith.constant 0 : i32
    %c0_i32_0 = arith.constant 0 : i32
    %c0_i32_1 = arith.constant 0 : i32
    return %c0_i32, %c0_i32_0 : i32, i32
  }
  func.func @transform_4(%arg0: i32) -> (i32, i32) {
    %c0_i32 = arith.constant 0 : i32
    %c0_i32_0 = arith.constant 0 : i32
    %c0_i32_1 = arith.constant 0 : i32
    return %c0_i32, %c0_i32_0 : i32, i32
  }
  func.func @transform_5(%arg0: i32) -> (i32, i32) {
    %c0_i32 = arith.constant 0 : i32
    %c0_i32_0 = arith.constant 0 : i32
    %c0_i32_1 = arith.constant 0 : i32
    return %c0_i32, %c0_i32_0 : i32, i32
  }
  func.func @transform_6(%arg0: i32) -> (i32, i32) {
    %c0_i32 = arith.constant 0 : i32
    %c0_i32_0 = arith.constant 0 : i32
    %c0_i32_1 = arith.constant 0 : i32
    return %c0_i32, %c0_i32_0 : i32, i32
  }
  func.func @transform_7(%arg0: i32) -> (i32, i32) {
    %c0_i32 = arith.constant 0 : i32
    %c0_i32_0 = arith.constant 0 : i32
    %c0_i32_1 = arith.constant 0 : i32
    return %c0_i32, %c0_i32_0 : i32, i32
  }
  func.func @transform_8(%arg0: i32) -> (i32, i32) {
    %c0_i32 = arith.constant 0 : i32
    %c0_i32_0 = arith.constant 0 : i32
    return %arg0, %c0_i32 : i32, i32
  }
}

</mosaic_0001>

<llo_original>
// kernel: tpu_custom_call.1
$region0: #{tpu_custom_call.1}
  #allocation0 [shape = 'u32[]', space=smem, size = 0x4, offset = 0x4, fixed_abs, tag = 'smem constant byte address 0x4 - core index']
  #allocation1 [shape = 'u32[144,128]{1,0:T(1,128)}', space=vmem, size = 0x12000, scoped, tag = 'internal scratch']
  %s0 = inlined_call_operand.hbm [shape: bf16[128,128], index: 0, kind: input, shape index: {}]
  %s1 = inlined_call_operand.hbm [shape: f32[128,128], index: 1, kind: input, shape index: {}]
  %s2 = inlined_call_operand.hbm [shape: bf16[128,128], index: 2, kind: input, shape index: {}]
  %s3 = inlined_call_operand.vmem [shape: f32[1,128], index: 3, kind: input, shape index: {}]
  %s4 = inlined_call_operand.hbm [shape: bf16[128,128], index: 4, kind: input, shape index: {}]
  %s5 = inlined_call_operand.vmem [shape: f32[1,128], index: 5, kind: input, shape index: {}]
  %s6 = inlined_call_operand.hbm [shape: bf16[128,256], index: 6, kind: input, shape index: {}]
  %s7 = inlined_call_operand.vmem [shape: f32[1,256], index: 7, kind: input, shape index: {}]
  %s8 = inlined_call_operand.hbm [shape: f32[128,384], index: 8, kind: output, shape index: {}]
  %s9 = sld [smem:[#allocation0]]
  $region62: #{tpu_custom_call.1} parent=0
    _
  %s11 = ssub.s32 1, %s9
  %s12 = scalar_select 0, %s11, %s9
  $region1: #{tpu_custom_call.1} parent=0
    #allocation2 [shape = 'u8[32768]{0}', space=vmem, size = 0x8000, scoped, tag = 'input window, operand 0, single buffered']
    #allocation3 [shape = 's32[1]{0}', space=sflag, size = 0x4, scoped, tag = 'scoped memory for tpu_custom_call.1']
    #allocation4 [shape = 's32[1]{0}', space=sflag, size = 0x4, scoped, tag = 'scoped memory for tpu_custom_call.1']
    #allocation5 [shape = 'u8[65536]{0}', space=vmem, size = 0x10000, scoped, tag = 'input window, operand 1, single buffered']
    #allocation6 [shape = 's32[1]{0}', space=sflag, size = 0x4, scoped, tag = 'scoped memory for tpu_custom_call.1']
    #allocation7 [shape = 'u8[32768]{0}', space=vmem, size = 0x8000, scoped, tag = 'input window, operand 2, single buffered']
    #allocation8 [shape = 'u8[32768]{0}', space=vmem, size = 0x8000, scoped, tag = 'input window, operand 4, single buffered']
    #allocation9 [shape = 's32[1]{0}', space=sflag, size = 0x4, scoped, tag = 'scoped memory for tpu_custom_call.1']
    #allocation10 [shape = 'u8[65536]{0}', space=vmem, size = 0x10000, scoped, tag = 'input window, operand 6, single buffered']
    #allocation11 [shape = 'u8[196608]{0}', space=vmem, size = 0x30000, scoped, tag = 'output window, operand 0, single buffered']
    %13 = vsyncpa [#allocation3], 0
    %14 = vsyncpa [#allocation6], 0
    %15 = vsyncpa [#allocation9], 0
    %16 = vsyncpa [#allocation4], 0
    // Predicated region
    $region2: #{tpu_custom_call.1} parent=1 // pred_check
      _
    $region3: #{tpu_custom_call.1} parent=1 // pred_check_branch
      %18 = sbr.rel (0) target = $region5
    $region4: #{tpu_custom_call.1} parent=1 // pred_region
      %s20 = ssub.s32 1024, 1024
      %21 = vsyncadd [#allocation3], %s20
      %s22 = sshll.u32 [#allocation2], 4
      %s23 = int_to_ptr.vmem [resolvable:$true] %s22
      %28 = dma.hbm_to_vmem [thread:$0]  %s0, 1024, %s23, [#allocation3], 64, 64, 4
    $region5: #{tpu_custom_call.1} parent=1 // pred_fallthru
      _
    // Predicated region
    $region6: #{tpu_custom_call.1} parent=1 // pred_check
      _
    $region7: #{tpu_custom_call.1} parent=1 // pred_check_branch
      %30 = sbr.rel (0) target = $region9
    $region8: #{tpu_custom_call.1} parent=1 // pred_region
      %s32 = ssub.s32 2048, 2048
      %33 = vsyncadd [#allocation6], %s32
      %s34 = sshll.u32 [#allocation5], 4
      %s35 = int_to_ptr.vmem [resolvable:$true] %s34
      %40 = dma.hbm_to_vmem [thread:$0]  %s1, 2048, %s35, [#allocation6], 128, 128, 8
    $region9: #{tpu_custom_call.1} parent=1 // pred_fallthru
      _
    // Predicated region
    $region10: #{tpu_custom_call.1} parent=1 // pred_check
      _
    $region11: #{tpu_custom_call.1} parent=1 // pred_check_branch
      %42 = sbr.rel (0) target = $region13
    $region12: #{tpu_custom_call.1} parent=1 // pred_region
      %s44 = ssub.s32 1024, 1024
      %45 = vsyncadd [#allocation6], %s44
      %s46 = sshll.u32 [#allocation7], 4
      %s47 = int_to_ptr.vmem [resolvable:$true] %s46
      %52 = dma.hbm_to_vmem [thread:$0]  %s2, 1024, %s47, [#allocation6], 64, 64, 4
    $region13: #{tpu_custom_call.1} parent=1 // pred_fallthru
      _
    // Predicated region
    $region14: #{tpu_custom_call.1} parent=1 // pred_check
      _
    $region15: #{tpu_custom_call.1} parent=1 // pred_check_branch
      %54 = sbr.rel (0) target = $region17
    $region16: #{tpu_custom_call.1} parent=1 // pred_region
      _
    $region17: #{tpu_custom_call.1} parent=1 // pred_fallthru
      _
    // Predicated region
    $region18: #{tpu_custom_call.1} parent=1 // pred_check
      _
    $region19: #{tpu_custom_call.1} parent=1 // pred_check_branch
      %56 = sbr.rel (0) target = $region21
    $region20: #{tpu_custom_call.1} parent=1 // pred_region
      %s58 = ssub.s32 1024, 1024
      %59 = vsyncadd [#allocation9], %s58
      %s60 = sshll.u32 [#allocation8], 4
      %s61 = int_to_ptr.vmem [resolvable:$true] %s60
      %66 = dma.hbm_to_vmem [thread:$0]  %s4, 1024, %s61, [#allocation9], 64, 64, 4
    $region21: #{tpu_custom_call.1} parent=1 // pred_fallthru
      _
    // Predicated region
    $region22: #{tpu_custom_call.1} parent=1 // pred_check
      _
    $region23: #{tpu_custom_call.1} parent=1 // pred_check_branch
      %68 = sbr.rel (0) target = $region25
    $region24: #{tpu_custom_call.1} parent=1 // pred_region
      _
    $region25: #{tpu_custom_call.1} parent=1 // pred_fallthru
      _
    // Predicated region
    $region26: #{tpu_custom_call.1} parent=1 // pred_check
      _
    $region27: #{tpu_custom_call.1} parent=1 // pred_check_branch
      %70 = sbr.rel (0) target = $region29
    $region28: #{tpu_custom_call.1} parent=1 // pred_region
      %s72 = ssub.s32 2048, 2048
      %73 = vsyncadd [#allocation9], %s72
      %s74 = sshll.u32 [#allocation10], 4
      %s75 = int_to_ptr.vmem [resolvable:$true] %s74
      %80 = dma.hbm_to_vmem [thread:$0]  %s6, 2048, %s75, [#allocation9], 128, 128, 8
    $region29: #{tpu_custom_call.1} parent=1 // pred_fallthru
      _
    // Predicated region
    $region30: #{tpu_custom_call.1} parent=1 // pred_check
      _
    $region31: #{tpu_custom_call.1} parent=1 // pred_check_branch
      %82 = sbr.rel (0) target = $region33
    $region32: #{tpu_custom_call.1} parent=1 // pred_region
      _
    $region33: #{tpu_custom_call.1} parent=1 // pred_fallthru
      _
    // Predicated region
    $region34: #{tpu_custom_call.1} parent=1 // pred_check
      _
    $region35: #{tpu_custom_call.1} parent=1 // pred_check_branch
      %84 = sbr.rel (0) target = $region37
    $region36: #{tpu_custom_call.1} parent=1 // pred_region
      %85 = dma.done [#allocation3], 1024
    $region37: #{tpu_custom_call.1} parent=1 // pred_fallthru
      _
    // Predicated region
    $region38: #{tpu_custom_call.1} parent=1 // pred_check
      _
    $region39: #{tpu_custom_call.1} parent=1 // pred_check_branch
      %87 = sbr.rel (0) target = $region41
    $region40: #{tpu_custom_call.1} parent=1 // pred_region
      %88 = dma.done [#allocation6], 2048
    $region41: #{tpu_custom_call.1} parent=1 // pred_fallthru
      _
    // Predicated region
    $region42: #{tpu_custom_call.1} parent=1 // pred_check
      _
    $region43: #{tpu_custom_call.1} parent=1 // pred_check_branch
      %90 = sbr.rel (0) target = $region45
    $region44: #{tpu_custom_call.1} parent=1 // pred_region
      %91 = dma.done [#allocation6], 1024
    $region45: #{tpu_custom_call.1} parent=1 // pred_fallthru
      _
    // Predicated region
    $region46: #{tpu_custom_call.1} parent=1 // pred_check
      _
    $region47: #{tpu_custom_call.1} parent=1 // pred_check_branch
      %93 = sbr.rel (0) target = $region49
    $region48: #{tpu_custom_call.1} parent=1 // pred_region
      %94 = dma.done [#allocation9], 1024
    $region49: #{tpu_custom_call.1} parent=1 // pred_fallthru
      _
    // Predicated region
    $region50: #{tpu_custom_call.1} parent=1 // pred_check
      _
    $region51: #{tpu_custom_call.1} parent=1 // pred_check_branch
      %96 = sbr.rel (0) target = $region53
    $region52: #{tpu_custom_call.1} parent=1 // pred_region
      %97 = dma.done [#allocation9], 2048
    $region53: #{tpu_custom_call.1} parent=1 // pred_fallthru
      _
    %v99 = vld [vmem:[#allocation2] sm:$0xf]
    %v100 = vld [vmem:[#allocation2 + $0x4] sm:$0xf]
    %v101 = vld [vmem:[#allocation2 + $0x8] sm:$0xf]
    %v102 = vld [vmem:[#allocation2 + $0xc] sm:$0xf]
    %v103 = vld [vmem:[#allocation2 + $0x10] sm:$0xf]
    %v104 = vld [vmem:[#allocation2 + $0x14] sm:$0xf]
    %v105 = vld [vmem:[#allocation2 + $0x18] sm:$0xf]
    %v106 = vld [vmem:[#allocation2 + $0x1c] sm:$0xf]
    %v107 = vld [vmem:[#allocation2 + $0x20] sm:$0xf]
    %v108 = vld [vmem:[#allocation2 + $0x24] sm:$0xf]
    %v109 = vld [vmem:[#allocation2 + $0x28] sm:$0xf]
    %v110 = vld [vmem:[#allocation2 + $0x2c] sm:$0xf]
    %v111 = vld [vmem:[#allocation2 + $0x30] sm:$0xf]
    %v112 = vld [vmem:[#allocation2 + $0x34] sm:$0xf]
    %v113 = vld [vmem:[#allocation2 + $0x38] sm:$0xf]
    %v114 = vld [vmem:[#allocation2 + $0x3c] sm:$0xf]
    %v115 = vld [vmem:[#allocation7] sm:$0xf]
    %v116 = vld [vmem:[#allocation7 + $0x4] sm:$0xf]
    %v117 = vld [vmem:[#allocation7 + $0x8] sm:$0xf]
    %v118 = vld [vmem:[#allocation7 + $0xc] sm:$0xf]
    %v119 = vld [vmem:[#allocation7 + $0x10] sm:$0xf]
    %v120 = vld [vmem:[#allocation7 + $0x14] sm:$0xf]
    %v121 = vld [vmem:[#allocation7 + $0x18] sm:$0xf]
    %v122 = vld [vmem:[#allocation7 + $0x1c] sm:$0xf]
    %v123 = vld [vmem:[#allocation7 + $0x20] sm:$0xf]
    %v124 = vld [vmem:[#allocation7 + $0x24] sm:$0xf]
    %v125 = vld [vmem:[#allocation7 + $0x28] sm:$0xf]
    %v126 = vld [vmem:[#allocation7 + $0x2c] sm:$0xf]
    %v127 = vld [vmem:[#allocation7 + $0x30] sm:$0xf]
    %v128 = vld [vmem:[#allocation7 + $0x34] sm:$0xf]
    %v129 = vld [vmem:[#allocation7 + $0x38] sm:$0xf]
    %v130 = vld [vmem:[#allocation7 + $0x3c] sm:$0xf]
    %v131 = vld [vmem:[%s3] sm:$0x1]
    %v133 = vlaneseq
    %v134 = vshrl.u32 %v133, 7
    %v135 = vsub.s32 0, %v134
    %v136 = vrot.slane %v131, %v135
    %v154 = vunpack.c.l.b16 %v99
    %v155 = vunpack.c.l.b16 %v100
    %v156 = vunpack.c.l.b16 %v101
    %v157 = vunpack.c.l.b16 %v102
    %v158 = vunpack.c.l.b16 %v103
    %v159 = vunpack.c.l.b16 %v104
    %v160 = vunpack.c.l.b16 %v105
    %v161 = vunpack.c.l.b16 %v106
    %v162 = vunpack.c.l.b16 %v107
    %v163 = vunpack.c.l.b16 %v108
    %v164 = vunpack.c.l.b16 %v109
    %v165 = vunpack.c.l.b16 %v110
    %v166 = vunpack.c.l.b16 %v111
    %v167 = vunpack.c.l.b16 %v112
    %v168 = vunpack.c.l.b16 %v113
    %v169 = vunpack.c.l.b16 %v114
    %v170 = vpack.c.b16 %v155, %v154
    %v171 = vpack.c.b16 %v157, %v156
    %v172 = vpack.c.b16 %v159, %v158
    %v173 = vpack.c.b16 %v161, %v160
    %v174 = vpack.c.b16 %v163, %v162
    %v175 = vpack.c.b16 %v165, %v164
    %v176 = vpack.c.b16 %v167, %v166
    %v177 = vpack.c.b16 %v169, %v168
    %v202 = vunpack.c.l.b16 %v115
    %v203 = vunpack.c.l.b16 %v116
    %v204 = vunpack.c.l.b16 %v117
    %v205 = vunpack.c.l.b16 %v118
    %v206 = vunpack.c.l.b16 %v119
    %v207 = vunpack.c.l.b16 %v120
    %v208 = vunpack.c.l.b16 %v121
    %v209 = vunpack.c.l.b16 %v122
    %v210 = vunpack.c.l.b16 %v123
    %v211 = vunpack.c.l.b16 %v124
    %v212 = vunpack.c.l.b16 %v125
    %v213 = vunpack.c.l.b16 %v126
    %v214 = vunpack.c.l.b16 %v127
    %v215 = vunpack.c.l.b16 %v128
    %v216 = vunpack.c.l.b16 %v129
    %v217 = vunpack.c.l.b16 %v130
    %v218 = vpack.c.b16 %v203, %v202
    %v219 = vpack.c.b16 %v205, %v204
    %v220 = vpack.c.b16 %v207, %v206
    %v221 = vpack.c.b16 %v209, %v208
    %v222 = vpack.c.b16 %v211, %v210
    %v223 = vpack.c.b16 %v213, %v212
    %v224 = vpack.c.b16 %v215, %v214
    %v225 = vpack.c.b16 %v217, %v216
    %234 = vmatprep.subr.bf16.mxu0 0
    %235 = vmatpush1.bf16.msra.mxu0 %v218
    %236 = vmatprep.subr.bf16.mxu0 0
    %237 = vmatpush1.bf16.msra.mxu0 %v219
    %238 = vmatprep.subr.bf16.mxu0 0
    %239 = vmatpush1.bf16.msra.mxu0 %v220
    %240 = vmatprep.subr.bf16.mxu0 0
    %241 = vmatpush1.bf16.msra.mxu0 %v221
    %242 = vmatprep.subr.bf16.mxu0 0
    %243 = vmatpush1.bf16.msra.mxu0 %v222
    %244 = vmatprep.subr.bf16.mxu0 0
    %245 = vmatpush1.bf16.msra.mxu0 %v223
    %246 = vmatprep.subr.bf16.mxu0 0
    %247 = vmatpush1.bf16.msra.mxu0 %v224
    %248 = vmatprep.subr.bf16.mxu0 0
    %249 = vmatpush1.bf16.msra.mxu0 %v225
    %250 = vmatprep.subr.bf16.mxu0 0
    %251 = vmatpush1.bf16.msra.mxu0 0
    %252 = vmatprep.subr.bf16.mxu0 0
    %253 = vmatpush1.bf16.msra.mxu0 0
    %254 = vmatprep.subr.bf16.mxu0 0
    %255 = vmatpush1.bf16.msra.mxu0 0
    %256 = vmatprep.subr.bf16.mxu0 0
    %257 = vmatpush1.bf16.msra.mxu0 0
    %258 = vmatprep.subr.bf16.mxu0 0
    %259 = vmatpush1.bf16.msra.mxu0 0
    %260 = vmatprep.subr.bf16.mxu0 0
    %261 = vmatpush1.bf16.msra.mxu0 0
    %262 = vmatprep.subr.bf16.mxu0 0
    %263 = vmatpush1.bf16.msra.mxu0 0
    %264 = vmatprep.subr.bf16.mxu0 0
    %265 = vmatpush1.bf16.msra.mxu0 0
    %266 = vmatprep.mubr.bf16.mxu0 0
    %267 = vmatmul.mubr.bf16.gmra.mrb[0].mxu0 %v170
    %v268 = vpop.f32.mrb[0].mxu0
    %v269 = vadd.f32 %v136, %v268
    %v270 = vpop.f32.mrb[0].mxu0
    %v271 = vpop.f32.mrb[0].mxu0
    %v272 = vadd.f32 %v136, %v271
    %v273 = vpop.f32.mrb[0].mxu0
    %274 = vmatprep.mubr.bf16.mxu0 0
    %275 = vmatmul.mubr.bf16.gmra.mrb[0].mxu0 %v171
    %v276 = vpop.f32.mrb[0].mxu0
    %v277 = vadd.f32 %v136, %v276
    %v278 = vpop.f32.mrb[0].mxu0
    %v279 = vpop.f32.mrb[0].mxu0
    %v280 = vadd.f32 %v136, %v279
    %v281 = vpop.f32.mrb[0].mxu0
    %282 = vmatprep.mubr.bf16.mxu0 0
    %283 = vmatmul.mubr.bf16.gmra.mrb[0].mxu0 %v172
    %v284 = vpop.f32.mrb[0].mxu0
    %v285 = vadd.f32 %v136, %v284
    %v286 = vpop.f32.mrb[0].mxu0
    %v287 = vpop.f32.mrb[0].mxu0
    %v288 = vadd.f32 %v136, %v287
    %v289 = vpop.f32.mrb[0].mxu0
    %290 = vmatprep.mubr.bf16.mxu0 0
    %291 = vmatmul.mubr.bf16.gmra.mrb[0].mxu0 %v173
    %v292 = vpop.f32.mrb[0].mxu0
    %v293 = vadd.f32 %v136, %v292
    %v294 = vpop.f32.mrb[0].mxu0
    %v295 = vpop.f32.mrb[0].mxu0
    %v296 = vadd.f32 %v136, %v295
    %v297 = vpop.f32.mrb[0].mxu0
    %298 = vmatprep.mubr.bf16.mxu0 0
    %299 = vmatmul.mubr.bf16.gmra.mrb[0].mxu0 %v174
    %v300 = vpop.f32.mrb[0].mxu0
    %v301 = vadd.f32 %v136, %v300
    %v302 = vpop.f32.mrb[0].mxu0
    %v303 = vpop.f32.mrb[0].mxu0
    %v304 = vadd.f32 %v136, %v303
    %v305 = vpop.f32.mrb[0].mxu0
    %306 = vmatprep.mubr.bf16.mxu0 0
    %307 = vmatmul.mubr.bf16.gmra.mrb[0].mxu0 %v175
    %v308 = vpop.f32.mrb[0].mxu0
    %v309 = vadd.f32 %v136, %v308
    %v310 = vpop.f32.mrb[0].mxu0
    %v311 = vpop.f32.mrb[0].mxu0
    %v312 = vadd.f32 %v136, %v311
    %v313 = vpop.f32.mrb[0].mxu0
    %314 = vmatprep.mubr.bf16.mxu0 0
    %315 = vmatmul.mubr.bf16.gmra.mrb[0].mxu0 %v176
    %v316 = vpop.f32.mrb[0].mxu0
    %v317 = vadd.f32 %v136, %v316
    %v318 = vpop.f32.mrb[0].mxu0
    %v319 = vpop.f32.mrb[0].mxu0
    %v320 = vadd.f32 %v136, %v319
    %v321 = vpop.f32.mrb[0].mxu0
    %322 = vmatprep.mubr.bf16.mxu0 0
    %323 = vmatmul.mubr.bf16.gmra.mrb[0].mxu0 %v177
    %v324 = vpop.f32.mrb[0].mxu0
    %v325 = vadd.f32 %v136, %v324
    %v326 = vpop.f32.mrb[0].mxu0
    %v327 = vpop.f32.mrb[0].mxu0
    %v328 = vadd.f32 %v136, %v327
    %v329 = vpop.f32.mrb[0].mxu0
    %330 = vdwg.mxu0
    %v331 = vmul.f32 %v269, 0.2
    %v332 = vmul.f32 %v272, 0.2
    %v333 = vmul.f32 %v277, 0.2
    %v334 = vmul.f32 %v280, 0.2
    %v335 = vmul.f32 %v285, 0.2
    %v336 = vmul.f32 %v288, 0.2
    %v337 = vmul.f32 %v293, 0.2
    %v338 = vmul.f32 %v296, 0.2
    %v339 = vmul.f32 %v301, 0.2
    %v340 = vmul.f32 %v304, 0.2
    %v341 = vmul.f32 %v309, 0.2
    %v342 = vmul.f32 %v312, 0.2
    %v343 = vmul.f32 %v317, 0.2
    %v344 = vmul.f32 %v320, 0.2
    %v345 = vmul.f32 %v325, 0.2
    %v346 = vmul.f32 %v328, 0.2
    %v347 = vmax.f32 %v269, %v331
    %v348 = vmax.f32 %v272, %v332
    %v349 = vmax.f32 %v277, %v333
    %v350 = vmax.f32 %v280, %v334
    %v351 = vmax.f32 %v285, %v335
    %v352 = vmax.f32 %v288, %v336
    %v353 = vmax.f32 %v293, %v337
    %v354 = vmax.f32 %v296, %v338
    %v355 = vmax.f32 %v301, %v339
    %v356 = vmax.f32 %v304, %v340
    %v357 = vmax.f32 %v309, %v341
    %v358 = vmax.f32 %v312, %v342
    %v359 = vmax.f32 %v317, %v343
    %v360 = vmax.f32 %v320, %v344
    %v361 = vmax.f32 %v325, %v345
    %v362 = vmax.f32 %v328, %v346
    %v363 = vpack.c.bf16 %v348, %v347
    %v364 = vpack.c.bf16 %v350, %v349
    %v365 = vpack.c.bf16 %v352, %v351
    %v366 = vpack.c.bf16 %v354, %v353
    %v367 = vpack.c.bf16 %v356, %v355
    %v368 = vpack.c.bf16 %v358, %v357
    %v369 = vpack.c.bf16 %v360, %v359
    %v370 = vpack.c.bf16 %v362, %v361
    %v371 = vld [vmem:[#allocation8] sm:$0xf]
    %v372 = vld [vmem:[#allocation8 + $0x4] sm:$0xf]
    %v373 = vld [vmem:[#allocation8 + $0x8] sm:$0xf]
    %v374 = vld [vmem:[#allocation8 + $0xc] sm:$0xf]
    %v375 = vld [vmem:[#allocation8 + $0x10] sm:$0xf]
    %v376 = vld [vmem:[#allocation8 + $0x14] sm:$0xf]
    %v377 = vld [vmem:[#allocation8 + $0x18] sm:$0xf]
    %v378 = vld [vmem:[#allocation8 + $0x1c] sm:$0xf]
    %v379 = vld [vmem:[#allocation8 + $0x20] sm:$0xf]
    %v380 = vld [vmem:[#allocation8 + $0x24] sm:$0xf]
    %v381 = vld [vmem:[#allocation8 + $0x28] sm:$0xf]
    %v382 = vld [vmem:[#allocation8 + $0x2c] sm:$0xf]
    %v383 = vld [vmem:[#allocation8 + $0x30] sm:$0xf]
    %v384 = vld [vmem:[#allocation8 + $0x34] sm:$0xf]
    %v385 = vld [vmem:[#allocation8 + $0x38] sm:$0xf]
    %v386 = vld [vmem:[#allocation8 + $0x3c] sm:$0xf]
    %v387 = vld [vmem:[%s5] sm:$0x1]
    %v389 = vlaneseq
    %v390 = vshrl.u32 %v389, 7
    %v391 = vsub.s32 0, %v390
    %v392 = vrot.slane %v387, %v391
    %v410 = vunpack.c.l.b16 %v371
    %v411 = vunpack.c.l.b16 %v372
    %v412 = vunpack.c.l.b16 %v373
    %v413 = vunpack.c.l.b16 %v374
    %v414 = vunpack.c.l.b16 %v375
    %v415 = vunpack.c.l.b16 %v376
    %v416 = vunpack.c.l.b16 %v377
    %v417 = vunpack.c.l.b16 %v378
    %v418 = vunpack.c.l.b16 %v379
    %v419 = vunpack.c.l.b16 %v380
    %v420 = vunpack.c.l.b16 %v381
    %v421 = vunpack.c.l.b16 %v382
    %v422 = vunpack.c.l.b16 %v383
    %v423 = vunpack.c.l.b16 %v384
    %v424 = vunpack.c.l.b16 %v385
    %v425 = vunpack.c.l.b16 %v386
    %v426 = vpack.c.b16 %v411, %v410
    %v427 = vpack.c.b16 %v413, %v412
    %v428 = vpack.c.b16 %v415, %v414
    %v429 = vpack.c.b16 %v417, %v416
    %v430 = vpack.c.b16 %v419, %v418
    %v431 = vpack.c.b16 %v421, %v420
    %v432 = vpack.c.b16 %v423, %v422
    %v433 = vpack.c.b16 %v425, %v424
    %442 = vmatprep.subr.bf16.mxu0 0
    %443 = vmatpush1.bf16.msra.mxu0 %v426
    %444 = vmatprep.subr.bf16.mxu0 0
    %445 = vmatpush1.bf16.msra.mxu0 %v427
    %446 = vmatprep.subr.bf16.mxu0 0
    %447 = vmatpush1.bf16.msra.mxu0 %v428
    %448 = vmatprep.subr.bf16.mxu0 0
    %449 = vmatpush1.bf16.msra.mxu0 %v429
    %450 = vmatprep.subr.bf16.mxu0 0
    %451 = vmatpush1.bf16.msra.mxu0 %v430
    %452 = vmatprep.subr.bf16.mxu0 0
    %453 = vmatpush1.bf16.msra.mxu0 %v431
    %454 = vmatprep.subr.bf16.mxu0 0
    %455 = vmatpush1.bf16.msra.mxu0 %v432
    %456 = vmatprep.subr.bf16.mxu0 0
    %457 = vmatpush1.bf16.msra.mxu0 %v433
    %458 = vmatprep.subr.bf16.mxu0 0
    %459 = vmatpush1.bf16.msra.mxu0 0
    %460 = vmatprep.subr.bf16.mxu0 0
    %461 = vmatpush1.bf16.msra.mxu0 0
    %462 = vmatprep.subr.bf16.mxu0 0
    %463 = vmatpush1.bf16.msra.mxu0 0
    %464 = vmatprep.subr.bf16.mxu0 0
    %465 = vmatpush1.bf16.msra.mxu0 0
    %466 = vmatprep.subr.bf16.mxu0 0
    %467 = vmatpush1.bf16.msra.mxu0 0
    %468 = vmatprep.subr.bf16.mxu0 0
    %469 = vmatpush1.bf16.msra.mxu0 0
    %470 = vmatprep.subr.bf16.mxu0 0
    %471 = vmatpush1.bf16.msra.mxu0 0
    %472 = vmatprep.subr.bf16.mxu0 0
    %473 = vmatpush1.bf16.msra.mxu0 0
    %474 = vmatprep.mubr.bf16.mxu0 0
    %475 = vmatmul.mubr.bf16.gmra.mrb[0].mxu0 %v363
    %v476 = vpop.f32.mrb[0].mxu0
    %v477 = vadd.f32 %v392, %v476
    %v478 = vpop.f32.mrb[0].mxu0
    %v479 = vpop.f32.mrb[0].mxu0
    %v480 = vadd.f32 %v392, %v479
    %v481 = vpop.f32.mrb[0].mxu0
    %482 = vmatprep.mubr.bf16.mxu0 0
    %483 = vmatmul.mubr.bf16.gmra.mrb[0].mxu0 %v364
    %v484 = vpop.f32.mrb[0].mxu0
    %v485 = vadd.f32 %v392, %v484
    %v486 = vpop.f32.mrb[0].mxu0
    %v487 = vpop.f32.mrb[0].mxu0
    %v488 = vadd.f32 %v392, %v487
    %v489 = vpop.f32.mrb[0].mxu0
    %490 = vmatprep.mubr.bf16.mxu0 0
    %491 = vmatmul.mubr.bf16.gmra.mrb[0].mxu0 %v365
    %v492 = vpop.f32.mrb[0].mxu0
    %v493 = vadd.f32 %v392, %v492
    %v494 = vpop.f32.mrb[0].mxu0
    %v495 = vpop.f32.mrb[0].mxu0
    %v496 = vadd.f32 %v392, %v495
    %v497 = vpop.f32.mrb[0].mxu0
    %498 = vmatprep.mubr.bf16.mxu0 0
    %499 = vmatmul.mubr.bf16.gmra.mrb[0].mxu0 %v366
    %v500 = vpop.f32.mrb[0].mxu0
    %v501 = vadd.f32 %v392, %v500
    %v502 = vpop.f32.mrb[0].mxu0
    %v503 = vpop.f32.mrb[0].mxu0
    %v504 = vadd.f32 %v392, %v503
    %v505 = vpop.f32.mrb[0].mxu0
    %506 = vmatprep.mubr.bf16.mxu0 0
    %507 = vmatmul.mubr.bf16.gmra.mrb[0].mxu0 %v367
    %v508 = vpop.f32.mrb[0].mxu0
    %v509 = vadd.f32 %v392, %v508
    %v510 = vpop.f32.mrb[0].mxu0
    %v511 = vpop.f32.mrb[0].mxu0
    %v512 = vadd.f32 %v392, %v511
    %v513 = vpop.f32.mrb[0].mxu0
    %514 = vmatprep.mubr.bf16.mxu0 0
    %515 = vmatmul.mubr.bf16.gmra.mrb[0].mxu0 %v368
    %v516 = vpop.f32.mrb[0].mxu0
    %v517 = vadd.f32 %v392, %v516
    %v518 = vpop.f32.mrb[0].mxu0
    %v519 = vpop.f32.mrb[0].mxu0
    %v520 = vadd.f32 %v392, %v519
    %v521 = vpop.f32.mrb[0].mxu0
    %522 = vmatprep.mubr.bf16.mxu0 0
    %523 = vmatmul.mubr.bf16.gmra.mrb[0].mxu0 %v369
    %v524 = vpop.f32.mrb[0].mxu0
    %v525 = vadd.f32 %v392, %v524
    %v526 = vpop.f32.mrb[0].mxu0
    %v527 = vpop.f32.mrb[0].mxu0
    %v528 = vadd.f32 %v392, %v527
    %v529 = vpop.f32.mrb[0].mxu0
    %530 = vmatprep.mubr.bf16.mxu0 0
    %531 = vmatmul.mubr.bf16.gmra.mrb[0].mxu0 %v370
    %v532 = vpop.f32.mrb[0].mxu0
    %v533 = vadd.f32 %v392, %v532
    %v534 = vpop.f32.mrb[0].mxu0
    %v535 = vpop.f32.mrb[0].mxu0
    %v536 = vadd.f32 %v392, %v535
    %v537 = vpop.f32.mrb[0].mxu0
    %538 = vdwg.mxu0
    %v539 = vmul.f32 %v477, 0.2
    %v540 = vmul.f32 %v480, 0.2
    %v541 = vmul.f32 %v485, 0.2
    %v542 = vmul.f32 %v488, 0.2
    %v543 = vmul.f32 %v493, 0.2
    %v544 = vmul.f32 %v496, 0.2
    %v545 = vmul.f32 %v501, 0.2
    %v546 = vmul.f32 %v504, 0.2
    %v547 = vmul.f32 %v509, 0.2
    %v548 = vmul.f32 %v512, 0.2
    %v549 = vmul.f32 %v517, 0.2
    %v550 = vmul.f32 %v520, 0.2
    %v551 = vmul.f32 %v525, 0.2
    %v552 = vmul.f32 %v528, 0.2
    %v553 = vmul.f32 %v533, 0.2
    %v554 = vmul.f32 %v536, 0.2
    %v555 = vmax.f32 %v477, %v539
    %v556 = vmax.f32 %v480, %v540
    %v557 = vmax.f32 %v485, %v541
    %v558 = vmax.f32 %v488, %v542
    %v559 = vmax.f32 %v493, %v543
    %v560 = vmax.f32 %v496, %v544
    %v561 = vmax.f32 %v501, %v545
    %v562 = vmax.f32 %v504, %v546
    %v563 = vmax.f32 %v509, %v547
    %v564 = vmax.f32 %v512, %v548
    %v565 = vmax.f32 %v517, %v549
    %v566 = vmax.f32 %v520, %v550
    %v567 = vmax.f32 %v525, %v551
    %v568 = vmax.f32 %v528, %v552
    %v569 = vmax.f32 %v533, %v553
    %v570 = vmax.f32 %v536, %v554
    %v571 = vpack.c.bf16 %v556, %v555
    %v572 = vpack.c.bf16 %v558, %v557
    %v573 = vpack.c.bf16 %v560, %v559
    %v574 = vpack.c.bf16 %v562, %v561
    %v575 = vpack.c.bf16 %v564, %v563
    %v576 = vpack.c.bf16 %v566, %v565
    %v577 = vpack.c.bf16 %v568, %v567
    %v578 = vpack.c.bf16 %v570, %v569
    %v579 = vld [vmem:[#allocation10] sm:$0xff]
    %v580 = vld [vmem:[#allocation10 + $0x8] sm:$0xff]
    %v581 = vld [vmem:[#allocation10 + $0x10] sm:$0xff]
    %v582 = vld [vmem:[#allocation10 + $0x18] sm:$0xff]
    %v583 = vld [vmem:[#allocation10 + $0x20] sm:$0xff]
    %v584 = vld [vmem:[#allocation10 + $0x28] sm:$0xff]
    %v585 = vld [vmem:[#allocation10 + $0x30] sm:$0xff]
    %v586 = vld [vmem:[#allocation10 + $0x38] sm:$0xff]
    %v587 = vld [vmem:[#allocation10 + $0x40] sm:$0xff]
    %v588 = vld [vmem:[#allocation10 + $0x48] sm:$0xff]
    %v589 = vld [vmem:[#allocation10 + $0x50] sm:$0xff]
    %v590 = vld [vmem:[#allocation10 + $0x58] sm:$0xff]
    %v591 = vld [vmem:[#allocation10 + $0x60] sm:$0xff]
    %v592 = vld [vmem:[#allocation10 + $0x68] sm:$0xff]
    %v593 = vld [vmem:[#allocation10 + $0x70] sm:$0xff]
    %v594 = vld [vmem:[#allocation10 + $0x78] sm:$0xff]
    %v595 = vld [vmem:[%s7] sm:$0x3]
    %v597 = vlaneseq
    %v598 = vshrl.u32 %v597, 7
    %v599 = vsub.s32 0, %v598
    %v600 = vrot.slane %v595, %v599
    %v601 = vlaneseq
    %v602 = vshrl.u32 %v601, 7
    %v603 = vsub.s32 1, %v602
    %v604 = vrot.slane %v595, %v603
    %v623 = vunpack.c.l.b16 %v579
    %v624 = vunpack.c.h.b16 %v579
    %v625 = vunpack.c.l.b16 %v580
    %v626 = vunpack.c.h.b16 %v580
    %v627 = vunpack.c.l.b16 %v581
    %v628 = vunpack.c.h.b16 %v581
    %v629 = vunpack.c.l.b16 %v582
    %v630 = vunpack.c.h.b16 %v582
    %v631 = vunpack.c.l.b16 %v583
    %v632 = vunpack.c.h.b16 %v583
    %v633 = vunpack.c.l.b16 %v584
    %v634 = vunpack.c.h.b16 %v584
    %v635 = vunpack.c.l.b16 %v585
    %v636 = vunpack.c.h.b16 %v585
    %v637 = vunpack.c.l.b16 %v586
    %v638 = vunpack.c.h.b16 %v586
    %v639 = vunpack.c.l.b16 %v587
    %v640 = vunpack.c.h.b16 %v587
    %v641 = vunpack.c.l.b16 %v588
    %v642 = vunpack.c.h.b16 %v588
    %v643 = vunpack.c.l.b16 %v589
    %v644 = vunpack.c.h.b16 %v589
    %v645 = vunpack.c.l.b16 %v590
    %v646 = vunpack.c.h.b16 %v590
    %v647 = vunpack.c.l.b16 %v591
    %v648 = vunpack.c.h.b16 %v591
    %v649 = vunpack.c.l.b16 %v592
    %v650 = vunpack.c.h.b16 %v592
    %v651 = vunpack.c.l.b16 %v593
    %v652 = vunpack.c.h.b16 %v593
    %v653 = vunpack.c.l.b16 %v594
    %v654 = vunpack.c.h.b16 %v594
    %v655 = vpack.c.b16 %v625, %v623
    %v656 = vpack.c.b16 %v626, %v624
    %v657 = vpack.c.b16 %v629, %v627
    %v658 = vpack.c.b16 %v630, %v628
    %v659 = vpack.c.b16 %v633, %v631
    %v660 = vpack.c.b16 %v634, %v632
    %v661 = vpack.c.b16 %v637, %v635
    %v662 = vpack.c.b16 %v638, %v636
    %v663 = vpack.c.b16 %v641, %v639
    %v664 = vpack.c.b16 %v642, %v640
    %v665 = vpack.c.b16 %v645, %v643
    %v666 = vpack.c.b16 %v646, %v644
    %v667 = vpack.c.b16 %v649, %v647
    %v668 = vpack.c.b16 %v650, %v648
    %v669 = vpack.c.b16 %v653, %v651
    %v670 = vpack.c.b16 %v654, %v652
    %687 = vmatprep.subr.bf16.mxu0 %v656
    %688 = vmatpush1.bf16.msra.mxu0 %v655
    %689 = vmatprep.subr.bf16.mxu0 %v658
    %690 = vmatpush1.bf16.msra.mxu0 %v657
    %691 = vmatprep.subr.bf16.mxu0 %v660
    %692 = vmatpush1.bf16.msra.mxu0 %v659
    %693 = vmatprep.subr.bf16.mxu0 %v662
    %694 = vmatpush1.bf16.msra.mxu0 %v661
    %695 = vmatprep.subr.bf16.mxu0 %v664
    %696 = vmatpush1.bf16.msra.mxu0 %v663
    %697 = vmatprep.subr.bf16.mxu0 %v666
    %698 = vmatpush1.bf16.msra.mxu0 %v665
    %699 = vmatprep.subr.bf16.mxu0 %v668
    %700 = vmatpush1.bf16.msra.mxu0 %v667
    %701 = vmatprep.subr.bf16.mxu0 %v670
    %702 = vmatpush1.bf16.msra.mxu0 %v669
    %703 = vmatprep.subr.bf16.mxu0 0
    %704 = vmatpush1.bf16.msra.mxu0 0
    %705 = vmatprep.subr.bf16.mxu0 0
    %706 = vmatpush1.bf16.msra.mxu0 0
    %707 = vmatprep.subr.bf16.mxu0 0
    %708 = vmatpush1.bf16.msra.mxu0 0
    %709 = vmatprep.subr.bf16.mxu0 0
    %710 = vmatpush1.bf16.msra.mxu0 0
    %711 = vmatprep.subr.bf16.mxu0 0
    %712 = vmatpush1.bf16.msra.mxu0 0
    %713 = vmatprep.subr.bf16.mxu0 0
    %714 = vmatpush1.bf16.msra.mxu0 0
    %715 = vmatprep.subr.bf16.mxu0 0
    %716 = vmatpush1.bf16.msra.mxu0 0
    %717 = vmatprep.subr.bf16.mxu0 0
    %718 = vmatpush1.bf16.msra.mxu0 0
    %719 = vmatprep.mubr.bf16.mxu0 0
    %720 = vmatmul.mubr.bf16.gmra.mrb[0].mxu0 %v571
    %v721 = vpop.f32.mrb[0].mxu0
    %v722 = vadd.f32 %v600, %v721
    %v723 = vpop.f32.mrb[0].mxu0
    %v724 = vadd.f32 %v604, %v723
    %v725 = vpop.f32.mrb[0].mxu0
    %v726 = vadd.f32 %v600, %v725
    %v727 = vpop.f32.mrb[0].mxu0
    %v728 = vadd.f32 %v604, %v727
    %729 = vmatprep.mubr.bf16.mxu0 0
    %730 = vmatmul.mubr.bf16.gmra.mrb[0].mxu0 %v572
    %v731 = vpop.f32.mrb[0].mxu0
    %v732 = vadd.f32 %v600, %v731
    %v733 = vpop.f32.mrb[0].mxu0
    %v734 = vadd.f32 %v604, %v733
    %v735 = vpop.f32.mrb[0].mxu0
    %v736 = vadd.f32 %v600, %v735
    %v737 = vpop.f32.mrb[0].mxu0
    %v738 = vadd.f32 %v604, %v737
    %739 = vmatprep.mubr.bf16.mxu0 0
    %740 = vmatmul.mubr.bf16.gmra.mrb[0].mxu0 %v573
    %v741 = vpop.f32.mrb[0].mxu0
    %v742 = vadd.f32 %v600, %v741
    %v743 = vpop.f32.mrb[0].mxu0
    %v744 = vadd.f32 %v604, %v743
    %v745 = vpop.f32.mrb[0].mxu0
    %v746 = vadd.f32 %v600, %v745
    %v747 = vpop.f32.mrb[0].mxu0
    %v748 = vadd.f32 %v604, %v747
    %749 = vmatprep.mubr.bf16.mxu0 0
    %750 = vmatmul.mubr.bf16.gmra.mrb[0].mxu0 %v574
    %v751 = vpop.f32.mrb[0].mxu0
    %v752 = vadd.f32 %v600, %v751
    %v753 = vpop.f32.mrb[0].mxu0
    %v754 = vadd.f32 %v604, %v753
    %v755 = vpop.f32.mrb[0].mxu0
    %v756 = vadd.f32 %v600, %v755
    %v757 = vpop.f32.mrb[0].mxu0
    %v758 = vadd.f32 %v604, %v757
    %759 = vmatprep.mubr.bf16.mxu0 0
    %760 = vmatmul.mubr.bf16.gmra.mrb[0].mxu0 %v575
    %v761 = vpop.f32.mrb[0].mxu0
    %v762 = vadd.f32 %v600, %v761
    %v763 = vpop.f32.mrb[0].mxu0
    %v764 = vadd.f32 %v604, %v763
    %v765 = vpop.f32.mrb[0].mxu0
    %v766 = vadd.f32 %v600, %v765
    %v767 = vpop.f32.mrb[0].mxu0
    %v768 = vadd.f32 %v604, %v767
    %769 = vmatprep.mubr.bf16.mxu0 0
    %770 = vmatmul.mubr.bf16.gmra.mrb[0].mxu0 %v576
    %v771 = vpop.f32.mrb[0].mxu0
    %v772 = vadd.f32 %v600, %v771
    %v773 = vpop.f32.mrb[0].mxu0
    %v774 = vadd.f32 %v604, %v773
    %v775 = vpop.f32.mrb[0].mxu0
    %v776 = vadd.f32 %v600, %v775
    %v777 = vpop.f32.mrb[0].mxu0
    %v778 = vadd.f32 %v604, %v777
    %779 = vmatprep.mubr.bf16.mxu0 0
    %780 = vmatmul.mubr.bf16.gmra.mrb[0].mxu0 %v577
    %v781 = vpop.f32.mrb[0].mxu0
    %v782 = vadd.f32 %v600, %v781
    %v783 = vpop.f32.mrb[0].mxu0
    %v784 = vadd.f32 %v604, %v783
    %v785 = vpop.f32.mrb[0].mxu0
    %v786 = vadd.f32 %v600, %v785
    %v787 = vpop.f32.mrb[0].mxu0
    %v788 = vadd.f32 %v604, %v787
    %789 = vmatprep.mubr.bf16.mxu0 0
    %790 = vmatmul.mubr.bf16.gmra.mrb[0].mxu0 %v578
    %v791 = vpop.f32.mrb[0].mxu0
    %v792 = vadd.f32 %v600, %v791
    %v793 = vpop.f32.mrb[0].mxu0
    %v794 = vadd.f32 %v604, %v793
    %v795 = vpop.f32.mrb[0].mxu0
    %v796 = vadd.f32 %v600, %v795
    %v797 = vpop.f32.mrb[0].mxu0
    %v798 = vadd.f32 %v604, %v797
    %799 = vdwg.mxu0
    %v800 = vmax.f32 %v724, 0.0
    %v801 = vmax.f32 %v728, 0.0
    %v802 = vmax.f32 %v734, 0.0
    %v803 = vmax.f32 %v738, 0.0
    %v804 = vmax.f32 %v744, 0.0
    %v805 = vmax.f32 %v748, 0.0
    %v806 = vmax.f32 %v754, 0.0
    %v807 = vmax.f32 %v758, 0.0
    %v808 = vmax.f32 %v764, 0.0
    %v809 = vmax.f32 %v768, 0.0
    %v810 = vmax.f32 %v774, 0.0
    %v811 = vmax.f32 %v778, 0.0
    %v812 = vmax.f32 %v784, 0.0
    %v813 = vmax.f32 %v788, 0.0
    %v814 = vmax.f32 %v794, 0.0
    %v815 = vmax.f32 %v798, 0.0
    %v816 = vand.u32 2147483647, %v724
    %v817 = vand.u32 2147483647, %v728
    %v818 = vand.u32 2147483647, %v734
    %v819 = vand.u32 2147483647, %v738
    %v820 = vand.u32 2147483647, %v744
    %v821 = vand.u32 2147483647, %v748
    %v822 = vand.u32 2147483647, %v754
    %v823 = vand.u32 2147483647, %v758
    %v824 = vand.u32 2147483647, %v764
    %v825 = vand.u32 2147483647, %v768
    %v826 = vand.u32 2147483647, %v774
    %v827 = vand.u32 2147483647, %v778
    %v828 = vand.u32 2147483647, %v784
    %v829 = vand.u32 2147483647, %v788
    %v830 = vand.u32 2147483647, %v794
    %v831 = vand.u32 2147483647, %v798
    %v832 = vsub.f32 0.0, %v816
    %v833 = vsub.f32 0.0, %v817
    %v834 = vsub.f32 0.0, %v818
    %v835 = vsub.f32 0.0, %v819
    %v836 = vsub.f32 0.0, %v820
    %v837 = vsub.f32 0.0, %v821
    %v838 = vsub.f32 0.0, %v822
    %v839 = vsub.f32 0.0, %v823
    %v840 = vsub.f32 0.0, %v824
    %v841 = vsub.f32 0.0, %v825
    %v842 = vsub.f32 0.0, %v826
    %v843 = vsub.f32 0.0, %v827
    %v844 = vsub.f32 0.0, %v828
    %v845 = vsub.f32 0.0, %v829
    %v846 = vsub.f32 0.0, %v830
    %v847 = vsub.f32 0.0, %v831
    %v848 = vmul.f32 %v832, 1.442695
    %v849 = vpow.pop %v848
    %v850 = vmul.f32 %v833, 1.442695
    %v851 = vpow.pop %v850
    %v852 = vmul.f32 %v834, 1.442695
    %v853 = vpow.pop %v852
    %v854 = vmul.f32 %v835, 1.442695
    %v855 = vpow.pop %v854
    %v856 = vmul.f32 %v836, 1.442695
    %v857 = vpow.pop %v856
    %v858 = vmul.f32 %v837, 1.442695
    %v859 = vpow.pop %v858
    %v860 = vmul.f32 %v838, 1.442695
    %v861 = vpow.pop %v860
    %v862 = vmul.f32 %v839, 1.442695
    %v863 = vpow.pop %v862
    %v864 = vmul.f32 %v840, 1.442695
    %v865 = vpow.pop %v864
    %v866 = vmul.f32 %v841, 1.442695
    %v867 = vpow.pop %v866
    %v868 = vmul.f32 %v842, 1.442695
    %v869 = vpow.pop %v868
    %v870 = vmul.f32 %v843, 1.442695
    %v871 = vpow.pop %v870
    %v872 = vmul.f32 %v844, 1.442695
    %v873 = vpow.pop %v872
    %v874 = vmul.f32 %v845, 1.442695
    %v875 = vpow.pop %v874
    %v876 = vmul.f32 %v846, 1.442695
    %v877 = vpow.pop %v876
    %v878 = vmul.f32 %v847, 1.442695
    %v879 = vpow.pop %v878
    %v880 = vadd.f32 %v849, 1.0
    %v881 = vlog2.pop %v880
    %v882 = vmul.f32 %v881, 0.6931472
    %v883 = vmul.f32 -0.5, %v849
    %v884 = vadd.f32 %v883, 1.0
    %v885 = vmul.f32 %v884, %v849
    %v886 = vand.u32 2147483647, %v849
    %vm887 = vcmp.lt.f32.partialorder %v886, 0.0004427343
    %v888 = vsel %vm887, %v885, %v882
    %v889 = vadd.f32 %v851, 1.0
    %v890 = vlog2.pop %v889
    %v891 = vmul.f32 %v890, 0.6931472
    %v892 = vmul.f32 -0.5, %v851
    %v893 = vadd.f32 %v892, 1.0
    %v894 = vmul.f32 %v893, %v851
    %v895 = vand.u32 2147483647, %v851
    %vm896 = vcmp.lt.f32.partialorder %v895, 0.0004427343
    %v897 = vsel %vm896, %v894, %v891
    %v898 = vadd.f32 %v853, 1.0
    %v899 = vlog2.pop %v898
    %v900 = vmul.f32 %v899, 0.6931472
    %v901 = vmul.f32 -0.5, %v853
    %v902 = vadd.f32 %v901, 1.0
    %v903 = vmul.f32 %v902, %v853
    %v904 = vand.u32 2147483647, %v853
    %vm905 = vcmp.lt.f32.partialorder %v904, 0.0004427343
    %v906 = vsel %vm905, %v903, %v900
    %v907 = vadd.f32 %v855, 1.0
    %v908 = vlog2.pop %v907
    %v909 = vmul.f32 %v908, 0.6931472
    %v910 = vmul.f32 -0.5, %v855
    %v911 = vadd.f32 %v910, 1.0
    %v912 = vmul.f32 %v911, %v855
    %v913 = vand.u32 2147483647, %v855
    %vm914 = vcmp.lt.f32.partialorder %v913, 0.0004427343
    %v915 = vsel %vm914, %v912, %v909
    %v916 = vadd.f32 %v857, 1.0
    %v917 = vlog2.pop %v916
    %v918 = vmul.f32 %v917, 0.6931472
    %v919 = vmul.f32 -0.5, %v857
    %v920 = vadd.f32 %v919, 1.0
    %v921 = vmul.f32 %v920, %v857
    %v922 = vand.u32 2147483647, %v857
    %vm923 = vcmp.lt.f32.partialorder %v922, 0.0004427343
    %v924 = vsel %vm923, %v921, %v918
    %v925 = vadd.f32 %v859, 1.0
    %v926 = vlog2.pop %v925
    %v927 = vmul.f32 %v926, 0.6931472
    %v928 = vmul.f32 -0.5, %v859
    %v929 = vadd.f32 %v928, 1.0
    %v930 = vmul.f32 %v929, %v859
    %v931 = vand.u32 2147483647, %v859
    %vm932 = vcmp.lt.f32.partialorder %v931, 0.0004427343
    %v933 = vsel %vm932, %v930, %v927
    %v934 = vadd.f32 %v861, 1.0
    %v935 = vlog2.pop %v934
    %v936 = vmul.f32 %v935, 0.6931472
    %v937 = vmul.f32 -0.5, %v861
    %v938 = vadd.f32 %v937, 1.0
    %v939 = vmul.f32 %v938, %v861
    %v940 = vand.u32 2147483647, %v861
    %vm941 = vcmp.lt.f32.partialorder %v940, 0.0004427343
    %v942 = vsel %vm941, %v939, %v936
    %v943 = vadd.f32 %v863, 1.0
    %v944 = vlog2.pop %v943
    %v945 = vmul.f32 %v944, 0.6931472
    %v946 = vmul.f32 -0.5, %v863
    %v947 = vadd.f32 %v946, 1.0
    %v948 = vmul.f32 %v947, %v863
    %v949 = vand.u32 2147483647, %v863
    %vm950 = vcmp.lt.f32.partialorder %v949, 0.0004427343
    %v951 = vsel %vm950, %v948, %v945
    %v952 = vadd.f32 %v865, 1.0
    %v953 = vlog2.pop %v952
    %v954 = vmul.f32 %v953, 0.6931472
    %v955 = vmul.f32 -0.5, %v865
    %v956 = vadd.f32 %v955, 1.0
    %v957 = vmul.f32 %v956, %v865
    %v958 = vand.u32 2147483647, %v865
    %vm959 = vcmp.lt.f32.partialorder %v958, 0.0004427343
    %v960 = vsel %vm959, %v957, %v954
    %v961 = vadd.f32 %v867, 1.0
    %v962 = vlog2.pop %v961
    %v963 = vmul.f32 %v962, 0.6931472
    %v964 = vmul.f32 -0.5, %v867
    %v965 = vadd.f32 %v964, 1.0
    %v966 = vmul.f32 %v965, %v867
    %v967 = vand.u32 2147483647, %v867
    %vm968 = vcmp.lt.f32.partialorder %v967, 0.0004427343
    %v969 = vsel %vm968, %v966, %v963
    %v970 = vadd.f32 %v869, 1.0
    %v971 = vlog2.pop %v970
    %v972 = vmul.f32 %v971, 0.6931472
    %v973 = vmul.f32 -0.5, %v869
    %v974 = vadd.f32 %v973, 1.0
    %v975 = vmul.f32 %v974, %v869
    %v976 = vand.u32 2147483647, %v869
    %vm977 = vcmp.lt.f32.partialorder %v976, 0.0004427343
    %v978 = vsel %vm977, %v975, %v972
    %v979 = vadd.f32 %v871, 1.0
    %v980 = vlog2.pop %v979
    %v981 = vmul.f32 %v980, 0.6931472
    %v982 = vmul.f32 -0.5, %v871
    %v983 = vadd.f32 %v982, 1.0
    %v984 = vmul.f32 %v983, %v871
    %v985 = vand.u32 2147483647, %v871
    %vm986 = vcmp.lt.f32.partialorder %v985, 0.0004427343
    %v987 = vsel %vm986, %v984, %v981
    %v988 = vadd.f32 %v873, 1.0
    %v989 = vlog2.pop %v988
    %v990 = vmul.f32 %v989, 0.6931472
    %v991 = vmul.f32 -0.5, %v873
    %v992 = vadd.f32 %v991, 1.0
    %v993 = vmul.f32 %v992, %v873
    %v994 = vand.u32 2147483647, %v873
    %vm995 = vcmp.lt.f32.partialorder %v994, 0.0004427343
    %v996 = vsel %vm995, %v993, %v990
    %v997 = vadd.f32 %v875, 1.0
    %v998 = vlog2.pop %v997
    %v999 = vmul.f32 %v998, 0.6931472
    %v1000 = vmul.f32 -0.5, %v875
    %v1001 = vadd.f32 %v1000, 1.0
    %v1002 = vmul.f32 %v1001, %v875
    %v1003 = vand.u32 2147483647, %v875
    %vm1004 = vcmp.lt.f32.partialorder %v1003, 0.0004427343
    %v1005 = vsel %vm1004, %v1002, %v999
    %v1006 = vadd.f32 %v877, 1.0
    %v1007 = vlog2.pop %v1006
    %v1008 = vmul.f32 %v1007, 0.6931472
    %v1009 = vmul.f32 -0.5, %v877
    %v1010 = vadd.f32 %v1009, 1.0
    %v1011 = vmul.f32 %v1010, %v877
    %v1012 = vand.u32 2147483647, %v877
    %vm1013 = vcmp.lt.f32.partialorder %v1012, 0.0004427343
    %v1014 = vsel %vm1013, %v1011, %v1008
    %v1015 = vadd.f32 %v879, 1.0
    %v1016 = vlog2.pop %v1015
    %v1017 = vmul.f32 %v1016, 0.6931472
    %v1018 = vmul.f32 -0.5, %v879
    %v1019 = vadd.f32 %v1018, 1.0
    %v1020 = vmul.f32 %v1019, %v879
    %v1021 = vand.u32 2147483647, %v879
    %vm1022 = vcmp.lt.f32.partialorder %v1021, 0.0004427343
    %v1023 = vsel %vm1022, %v1020, %v1017
    %v1024 = vadd.f32 %v800, %v888
    %v1025 = vadd.f32 %v801, %v897
    %v1026 = vadd.f32 %v802, %v906
    %v1027 = vadd.f32 %v803, %v915
    %v1028 = vadd.f32 %v804, %v924
    %v1029 = vadd.f32 %v805, %v933
    %v1030 = vadd.f32 %v806, %v942
    %v1031 = vadd.f32 %v807, %v951
    %v1032 = vadd.f32 %v808, %v960
    %v1033 = vadd.f32 %v809, %v969
    %v1034 = vadd.f32 %v810, %v978
    %v1035 = vadd.f32 %v811, %v987
    %v1036 = vadd.f32 %v812, %v996
    %v1037 = vadd.f32 %v813, %v1005
    %v1038 = vadd.f32 %v814, %v1014
    %v1039 = vadd.f32 %v815, %v1023
    %v1040 = vmax.f32 %v1024, 0.0001
    %v1041 = vmax.f32 %v1025, 0.0001
    %v1042 = vmax.f32 %v1026, 0.0001
    %v1043 = vmax.f32 %v1027, 0.0001
    %v1044 = vmax.f32 %v1028, 0.0001
    %v1045 = vmax.f32 %v1029, 0.0001
    %v1046 = vmax.f32 %v1030, 0.0001
    %v1047 = vmax.f32 %v1031, 0.0001
    %v1048 = vmax.f32 %v1032, 0.0001
    %v1049 = vmax.f32 %v1033, 0.0001
    %v1050 = vmax.f32 %v1034, 0.0001
    %v1051 = vmax.f32 %v1035, 0.0001
    %v1052 = vmax.f32 %v1036, 0.0001
    %v1053 = vmax.f32 %v1037, 0.0001
    %v1054 = vmax.f32 %v1038, 0.0001
    %v1055 = vmax.f32 %v1039, 0.0001
    %v1056 = vmin.f32 %v1040, 10.0
    %v1057 = vmin.f32 %v1041, 10.0
    %v1058 = vmin.f32 %v1042, 10.0
    %v1059 = vmin.f32 %v1043, 10.0
    %v1060 = vmin.f32 %v1044, 10.0
    %v1061 = vmin.f32 %v1045, 10.0
    %v1062 = vmin.f32 %v1046, 10.0
    %v1063 = vmin.f32 %v1047, 10.0
    %v1064 = vmin.f32 %v1048, 10.0
    %v1065 = vmin.f32 %v1049, 10.0
    %v1066 = vmin.f32 %v1050, 10.0
    %v1067 = vmin.f32 %v1051, 10.0
    %v1068 = vmin.f32 %v1052, 10.0
    %v1069 = vmin.f32 %v1053, 10.0
    %v1070 = vmin.f32 %v1054, 10.0
    %v1071 = vmin.f32 %v1055, 10.0
    %v1072 = vmul.f32 %v1056, 0.5
    %v1073 = vmul.f32 %v1057, 0.5
    %v1074 = vmul.f32 %v1058, 0.5
    %v1075 = vmul.f32 %v1059, 0.5
    %v1076 = vmul.f32 %v1060, 0.5
    %v1077 = vmul.f32 %v1061, 0.5
    %v1078 = vmul.f32 %v1062, 0.5
    %v1079 = vmul.f32 %v1063, 0.5
    %v1080 = vmul.f32 %v1064, 0.5
    %v1081 = vmul.f32 %v1065, 0.5
    %v1082 = vmul.f32 %v1066, 0.5
    %v1083 = vmul.f32 %v1067, 0.5
    %v1084 = vmul.f32 %v1068, 0.5
    %v1085 = vmul.f32 %v1069, 0.5
    %v1086 = vmul.f32 %v1070, 0.5
    %v1087 = vmul.f32 %v1071, 0.5
    %v1088 = vmul.f32 %v1072, 1.442695
    %v1089 = vpow.pop %v1088
    %v1090 = vmul.f32 %v1073, 1.442695
    %v1091 = vpow.pop %v1090
    %v1092 = vmul.f32 %v1074, 1.442695
    %v1093 = vpow.pop %v1092
    %v1094 = vmul.f32 %v1075, 1.442695
    %v1095 = vpow.pop %v1094
    %v1096 = vmul.f32 %v1076, 1.442695
    %v1097 = vpow.pop %v1096
    %v1098 = vmul.f32 %v1077, 1.442695
    %v1099 = vpow.pop %v1098
    %v1100 = vmul.f32 %v1078, 1.442695
    %v1101 = vpow.pop %v1100
    %v1102 = vmul.f32 %v1079, 1.442695
    %v1103 = vpow.pop %v1102
    %v1104 = vmul.f32 %v1080, 1.442695
    %v1105 = vpow.pop %v1104
    %v1106 = vmul.f32 %v1081, 1.442695
    %v1107 = vpow.pop %v1106
    %v1108 = vmul.f32 %v1082, 1.442695
    %v1109 = vpow.pop %v1108
    %v1110 = vmul.f32 %v1083, 1.442695
    %v1111 = vpow.pop %v1110
    %v1112 = vmul.f32 %v1084, 1.442695
    %v1113 = vpow.pop %v1112
    %v1114 = vmul.f32 %v1085, 1.442695
    %v1115 = vpow.pop %v1114
    %v1116 = vmul.f32 %v1086, 1.442695
    %v1117 = vpow.pop %v1116
    %v1118 = vmul.f32 %v1087, 1.442695
    %v1119 = vpow.pop %v1118
    %v1120 = vadd.f32 %v1089, 1e-06
    %v1121 = vadd.f32 %v1091, 1e-06
    %v1122 = vadd.f32 %v1093, 1e-06
    %v1123 = vadd.f32 %v1095, 1e-06
    %v1124 = vadd.f32 %v1097, 1e-06
    %v1125 = vadd.f32 %v1099, 1e-06
    %v1126 = vadd.f32 %v1101, 1e-06
    %v1127 = vadd.f32 %v1103, 1e-06
    %v1128 = vadd.f32 %v1105, 1e-06
    %v1129 = vadd.f32 %v1107, 1e-06
    %v1130 = vadd.f32 %v1109, 1e-06
    %v1131 = vadd.f32 %v1111, 1e-06
    %v1132 = vadd.f32 %v1113, 1e-06
    %v1133 = vadd.f32 %v1115, 1e-06
    %v1134 = vadd.f32 %v1117, 1e-06
    %v1135 = vadd.f32 %v1119, 1e-06
    %v1136 = vld [vmem:[#allocation5] sm:$0xff]
    %v1137 = vld [vmem:[#allocation5 + $0x8] sm:$0xff]
    %v1138 = vld [vmem:[#allocation5 + $0x10] sm:$0xff]
    %v1139 = vld [vmem:[#allocation5 + $0x18] sm:$0xff]
    %v1140 = vld [vmem:[#allocation5 + $0x20] sm:$0xff]
    %v1141 = vld [vmem:[#allocation5 + $0x28] sm:$0xff]
    %v1142 = vld [vmem:[#allocation5 + $0x30] sm:$0xff]
    %v1143 = vld [vmem:[#allocation5 + $0x38] sm:$0xff]
    %v1144 = vld [vmem:[#allocation5 + $0x40] sm:$0xff]
    %v1145 = vld [vmem:[#allocation5 + $0x48] sm:$0xff]
    %v1146 = vld [vmem:[#allocation5 + $0x50] sm:$0xff]
    %v1147 = vld [vmem:[#allocation5 + $0x58] sm:$0xff]
    %v1148 = vld [vmem:[#allocation5 + $0x60] sm:$0xff]
    %v1149 = vld [vmem:[#allocation5 + $0x68] sm:$0xff]
    %v1150 = vld [vmem:[#allocation5 + $0x70] sm:$0xff]
    %v1151 = vld [vmem:[#allocation5 + $0x78] sm:$0xff]
    %v1152 = vmul.f32 %v1136, %v1120
    %v1153 = vmul.f32 %v1137, %v1121
    %v1154 = vmul.f32 %v1138, %v1122
    %v1155 = vmul.f32 %v1139, %v1123
    %v1156 = vmul.f32 %v1140, %v1124
    %v1157 = vmul.f32 %v1141, %v1125
    %v1158 = vmul.f32 %v1142, %v1126
    %v1159 = vmul.f32 %v1143, %v1127
    %v1160 = vmul.f32 %v1144, %v1128
    %v1161 = vmul.f32 %v1145, %v1129
    %v1162 = vmul.f32 %v1146, %v1130
    %v1163 = vmul.f32 %v1147, %v1131
    %v1164 = vmul.f32 %v1148, %v1132
    %v1165 = vmul.f32 %v1149, %v1133
    %v1166 = vmul.f32 %v1150, %v1134
    %v1167 = vmul.f32 %v1151, %v1135
    %v1168 = vadd.f32 %v722, %v1152
    %v1169 = vadd.f32 %v726, %v1153
    %v1170 = vadd.f32 %v732, %v1154
    %v1171 = vadd.f32 %v736, %v1155
    %v1172 = vadd.f32 %v742, %v1156
    %v1173 = vadd.f32 %v746, %v1157
    %v1174 = vadd.f32 %v752, %v1158
    %v1175 = vadd.f32 %v756, %v1159
    %v1176 = vadd.f32 %v762, %v1160
    %v1177 = vadd.f32 %v766, %v1161
    %v1178 = vadd.f32 %v772, %v1162
    %v1179 = vadd.f32 %v776, %v1163
    %v1180 = vadd.f32 %v782, %v1164
    %v1181 = vadd.f32 %v786, %v1165
    %v1182 = vadd.f32 %v792, %v1166
    %v1183 = vadd.f32 %v796, %v1167
    %1184 = vst [vmem:[#allocation11] sm:$0xff] %v1168
    %1185 = vst [vmem:[#allocation11 + $0x18] sm:$0xff] %v1169
    %1186 = vst [vmem:[#allocation11 + $0x30] sm:$0xff] %v1170
    %1187 = vst [vmem:[#allocation11 + $0x48] sm:$0xff] %v1171
    %1188 = vst [vmem:[#allocation11 + $0x60] sm:$0xff] %v1172
    %1189 = vst [vmem:[#allocation11 + $0x78] sm:$0xff] %v1173
    %1190 = vst [vmem:[#allocation11 + $0x90] sm:$0xff] %v1174
    %1191 = vst [vmem:[#allocation11 + $0xa8] sm:$0xff] %v1175
    %1192 = vst [vmem:[#allocation11 + $0xc0] sm:$0xff] %v1176
    %1193 = vst [vmem:[#allocation11 + $0xd8] sm:$0xff] %v1177
    %1194 = vst [vmem:[#allocation11 + $0xf0] sm:$0xff] %v1178
    %1195 = vst [vmem:[#allocation11 + $0x108] sm:$0xff] %v1179
    %1196 = vst [vmem:[#allocation11 + $0x120] sm:$0xff] %v1180
    %1197 = vst [vmem:[#allocation11 + $0x138] sm:$0xff] %v1181
    %1198 = vst [vmem:[#allocation11 + $0x150] sm:$0xff] %v1182
    %1199 = vst [vmem:[#allocation11 + $0x168] sm:$0xff] %v1183
    %1200 = vst [vmem:[#allocation11 + $0x8] sm:$0xff] %v722
    %1201 = vst [vmem:[#allocation11 + $0x20] sm:$0xff] %v726
    %1202 = vst [vmem:[#allocation11 + $0x38] sm:$0xff] %v732
    %1203 = vst [vmem:[#allocation11 + $0x50] sm:$0xff] %v736
    %1204 = vst [vmem:[#allocation11 + $0x68] sm:$0xff] %v742
    %1205 = vst [vmem:[#allocation11 + $0x80] sm:$0xff] %v746
    %1206 = vst [vmem:[#allocation11 + $0x98] sm:$0xff] %v752
    %1207 = vst [vmem:[#allocation11 + $0xb0] sm:$0xff] %v756
    %1208 = vst [vmem:[#allocation11 + $0xc8] sm:$0xff] %v762
    %1209 = vst [vmem:[#allocation11 + $0xe0] sm:$0xff] %v766
    %1210 = vst [vmem:[#allocation11 + $0xf8] sm:$0xff] %v772
    %1211 = vst [vmem:[#allocation11 + $0x110] sm:$0xff] %v776
    %1212 = vst [vmem:[#allocation11 + $0x128] sm:$0xff] %v782
    %1213 = vst [vmem:[#allocation11 + $0x140] sm:$0xff] %v786
    %1214 = vst [vmem:[#allocation11 + $0x158] sm:$0xff] %v792
    %1215 = vst [vmem:[#allocation11 + $0x170] sm:$0xff] %v796
    %1216 = vst [vmem:[#allocation11 + $0x10] sm:$0xff] %v1056
    %1217 = vst [vmem:[#allocation11 + $0x28] sm:$0xff] %v1057
    %1218 = vst [vmem:[#allocation11 + $0x40] sm:$0xff] %v1058
    %1219 = vst [vmem:[#allocation11 + $0x58] sm:$0xff] %v1059
    %1220 = vst [vmem:[#allocation11 + $0x70] sm:$0xff] %v1060
    %1221 = vst [vmem:[#allocation11 + $0x88] sm:$0xff] %v1061
    %1222 = vst [vmem:[#allocation11 + $0xa0] sm:$0xff] %v1062
    %1223 = vst [vmem:[#allocation11 + $0xb8] sm:$0xff] %v1063
    %1224 = vst [vmem:[#allocation11 + $0xd0] sm:$0xff] %v1064
    %1225 = vst [vmem:[#allocation11 + $0xe8] sm:$0xff] %v1065
    %1226 = vst [vmem:[#allocation11 + $0x100] sm:$0xff] %v1066
    %1227 = vst [vmem:[#allocation11 + $0x118] sm:$0xff] %v1067
    %1228 = vst [vmem:[#allocation11 + $0x130] sm:$0xff] %v1068
    %1229 = vst [vmem:[#allocation11 + $0x148] sm:$0xff] %v1069
    %1230 = vst [vmem:[#allocation11 + $0x160] sm:$0xff] %v1070
    %1231 = vst [vmem:[#allocation11 + $0x178] sm:$0xff] %v1071
    // Predicated region
    $region54: #{tpu_custom_call.1} parent=1 // pred_check
      _
    $region55: #{tpu_custom_call.1} parent=1 // pred_check_branch
      %1233 = sbr.rel (0) target = $region57
    $region56: #{tpu_custom_call.1} parent=1 // pred_region
      %s1235 = ssub.s32 6144, 6144
      %1236 = vsyncadd [#allocation4], %s1235
      %s1237 = sshll.u32 [#allocation11], 4
      %s1238 = int_to_ptr.vmem [resolvable:$true] %s1237
      %1243 = dma.vmem_to_hbm [thread:$0]  %s1238, 6144, %s8, [#allocation4], 384, 384, 24
    $region57: #{tpu_custom_call.1} parent=1 // pred_fallthru
      _
    // Predicated region
    $region58: #{tpu_custom_call.1} parent=1 // pred_check
      _
    $region59: #{tpu_custom_call.1} parent=1 // pred_check_branch
      %1245 = sbr.rel (0) target = $region61
    $region60: #{tpu_custom_call.1} parent=1 // pred_region
      %1246 = dma.done [#allocation4], 6144
    $region61: #{tpu_custom_call.1} parent=1 // pred_fallthru
      _
    %1247 = vsyncpa [#allocation3], 1
    %1248 = vsyncpa [#allocation6], 1
    %1249 = vsyncpa [#allocation9], 1
    %1250 = vsyncpa [#allocation4], 1

// kernel: tpu_custom_call.1
$region0: #{tpu_custom_call.1}
  #allocation0 [shape = 'u32[]', space=smem, size = 0x4, offset = 0x4, fixed_abs, tag = 'smem constant byte address 0x4 - core index']
  #allocation1 [shape = 'u32[144,128]{1,0:T(1,128)}', space=vmem, size = 0x12000, scoped, tag = 'internal scratch']
  %s0 = inlined_call_operand.hbm [shape: bf16[128,128], index: 0, kind: input, shape index: {}]
  %s1 = inlined_call_operand.hbm [shape: f32[128,128], index: 1, kind: input, shape index: {}]
  %s2 = inlined_call_operand.hbm [shape: bf16[128,128], index: 2, kind: input, shape index: {}]
  %s3 = inlined_call_operand.vmem [shape: f32[1,128], index: 3, kind: input, shape index: {}]
  %s4 = inlined_call_operand.hbm [shape: bf16[128,128], index: 4, kind: input, shape index: {}]
  %s5 = inlined_call_operand.vmem [shape: f32[1,128], index: 5, kind: input, shape index: {}]
  %s6 = inlined_call_operand.hbm [shape: bf16[128,256], index: 6, kind: input, shape index: {}]
  %s7 = inlined_call_operand.vmem [shape: f32[1,256], index: 7, kind: input, shape index: {}]
  %s8 = inlined_call_operand.hbm [shape: f32[128,384], index: 8, kind: output, shape index: {}]
  %s9 = sld [smem:[#allocation0]]
  $region62: #{tpu_custom_call.1} parent=0
    _
  %s11 = ssub.s32 1, %s9
  %s12 = scalar_select 0, %s11, %s9
  $region1: #{tpu_custom_call.1} parent=0
    #allocation2 [shape = 'u8[32768]{0}', space=vmem, size = 0x8000, scoped, tag = 'input window, operand 0, single buffered']
    #allocation3 [shape = 's32[1]{0}', space=sflag, size = 0x4, scoped, tag = 'scoped memory for tpu_custom_call.1']
    #allocation4 [shape = 's32[1]{0}', space=sflag, size = 0x4, scoped, tag = 'scoped memory for tpu_custom_call.1']
    #allocation5 [shape = 'u8[65536]{0}', space=vmem, size = 0x10000, scoped, tag = 'input window, operand 1, single buffered']
    #allocation6 [shape = 's32[1]{0}', space=sflag, size = 0x4, scoped, tag = 'scoped memory for tpu_custom_call.1']
    #allocation7 [shape = 'u8[32768]{0}', space=vmem, size = 0x8000, scoped, tag = 'input window, operand 2, single buffered']
    #allocation8 [shape = 'u8[32768]{0}', space=vmem, size = 0x8000, scoped, tag = 'input window, operand 4, single buffered']
    #allocation9 [shape = 's32[1]{0}', space=sflag, size = 0x4, scoped, tag = 'scoped memory for tpu_custom_call.1']
    #allocation10 [shape = 'u8[65536]{0}', space=vmem, size = 0x10000, scoped, tag = 'input window, operand 6, single buffered']
    #allocation11 [shape = 'u8[196608]{0}', space=vmem, size = 0x30000, scoped, tag = 'output window, operand 0, single buffered']
    %13 = vsyncpa [#allocation3], 0
    %14 = vsyncpa [#allocation6], 0
    %15 = vsyncpa [#allocation9], 0
    %16 = vsyncpa [#allocation4], 0
    // Predicated region
    $region2: #{tpu_custom_call.1} parent=1 // pred_check
      _
    $region3: #{tpu_custom_call.1} parent=1 // pred_check_branch
      %18 = sbr.rel (0) target = $region5
    $region4: #{tpu_custom_call.1} parent=1 // pred_region
      %s20 = ssub.s32 1024, 1024
      %21 = vsyncadd [#allocation3], %s20
      %s22 = sshll.u32 [#allocation2], 4
      %s23 = int_to_ptr.vmem [resolvable:$true] %s22
      %28 = dma.hbm_to_vmem [thread:$0]  %s0, 1024, %s23, [#allocation3], 64, 64, 4
    $region5: #{tpu_custom_call.1} parent=1 // pred_fallthru
      _
    // Predicated region
    $region6: #{tpu_custom_call.1} parent=1 // pred_check
      _
    $region7: #{tpu_custom_call.1} parent=1 // pred_check_branch
      %30 = sbr.rel (0) target = $region9
    $region8: #{tpu_custom_call.1} parent=1 // pred_region
      %s32 = ssub.s32 2048, 2048
      %33 = vsyncadd [#allocation6], %s32
      %s34 = sshll.u32 [#allocation5], 4
      %s35 = int_to_ptr.vmem [resolvable:$true] %s34
      %40 = dma.hbm_to_vmem [thread:$0]  %s1, 2048, %s35, [#allocation6], 128, 128, 8
    $region9: #{tpu_custom_call.1} parent=1 // pred_fallthru
      _
    // Predicated region
    $region10: #{tpu_custom_call.1} parent=1 // pred_check
      _
    $region11: #{tpu_custom_call.1} parent=1 // pred_check_branch
      %42 = sbr.rel (0) target = $region13
    $region12: #{tpu_custom_call.1} parent=1 // pred_region
      %s44 = ssub.s32 1024, 1024
      %45 = vsyncadd [#allocation6], %s44
      %s46 = sshll.u32 [#allocation7], 4
      %s47 = int_to_ptr.vmem [resolvable:$true] %s46
      %52 = dma.hbm_to_vmem [thread:$0]  %s2, 1024, %s47, [#allocation6], 64, 64, 4
    $region13: #{tpu_custom_call.1} parent=1 // pred_fallthru
      _
    // Predicated region
    $region14: #{tpu_custom_call.1} parent=1 // pred_check
      _
    $region15: #{tpu_custom_call.1} parent=1 // pred_check_branch
      %54 = sbr.rel (0) target = $region17
    $region16: #{tpu_custom_call.1} parent=1 // pred_region
      _
    $region17: #{tpu_custom_call.1} parent=1 // pred_fallthru
      _
    // Predicated region
    $region18: #{tpu_custom_call.1} parent=1 // pred_check
      _
    $region19: #{tpu_custom_call.1} parent=1 // pred_check_branch
      %56 = sbr.rel (0) target = $region21
    $region20: #{tpu_custom_call.1} parent=1 // pred_region
      %s58 = ssub.s32 1024, 1024
      %59 = vsyncadd [#allocation9], %s58
      %s60 = sshll.u32 [#allocation8], 4
      %s61 = int_to_ptr.vmem [resolvable:$true] %s60
      %66 = dma.hbm_to_vmem [thread:$0]  %s4, 1024, %s61, [#allocation9], 64, 64, 4
    $region21: #{tpu_custom_call.1} parent=1 // pred_fallthru
      _
    // Predicated region
    $region22: #{tpu_custom_call.1} parent=1 // pred_check
      _
    $region23: #{tpu_custom_call.1} parent=1 // pred_check_branch
      %68 = sbr.rel (0) target = $region25
    $region24: #{tpu_custom_call.1} parent=1 // pred_region
      _
    $region25: #{tpu_custom_call.1} parent=1 // pred_fallthru
      _
    // Predicated region
    $region26: #{tpu_custom_call.1} parent=1 // pred_check
      _
    $region27: #{tpu_custom_call.1} parent=1 // pred_check_branch
      %70 = sbr.rel (0) target = $region29
    $region28: #{tpu_custom_call.1} parent=1 // pred_region
      %s72 = ssub.s32 2048, 2048
      %73 = vsyncadd [#allocation9], %s72
      %s74 = sshll.u32 [#allocation10], 4
      %s75 = int_to_ptr.vmem [resolvable:$true] %s74
      %80 = dma.hbm_to_vmem [thread:$0]  %s6, 2048, %s75, [#allocation9], 128, 128, 8
    $region29: #{tpu_custom_call.1} parent=1 // pred_fallthru
      _
    // Predicated region
    $region30: #{tpu_custom_call.1} parent=1 // pred_check
      _
    $region31: #{tpu_custom_call.1} parent=1 // pred_check_branch
      %82 = sbr.rel (0) target = $region33
    $region32: #{tpu_custom_call.1} parent=1 // pred_region
      _
    $region33: #{tpu_custom_call.1} parent=1 // pred_fallthru
      _
    // Predicated region
    $region34: #{tpu_custom_call.1} parent=1 // pred_check
      _
    $region35: #{tpu_custom_call.1} parent=1 // pred_check_branch
      %84 = sbr.rel (0) target = $region37
    $region36: #{tpu_custom_call.1} parent=1 // pred_region
      %85 = dma.done [#allocation3], 1024
    $region37: #{tpu_custom_call.1} parent=1 // pred_fallthru
      _
    // Predicated region
    $region38: #{tpu_custom_call.1} parent=1 // pred_check
      _
    $region39: #{tpu_custom_call.1} parent=1 // pred_check_branch
      %87 = sbr.rel (0) target = $region41
    $region40: #{tpu_custom_call.1} parent=1 // pred_region
      %88 = dma.done [#allocation6], 2048
    $region41: #{tpu_custom_call.1} parent=1 // pred_fallthru
      _
    // Predicated region
    $region42: #{tpu_custom_call.1} parent=1 // pred_check
      _
    $region43: #{tpu_custom_call.1} parent=1 // pred_check_branch
      %90 = sbr.rel (0) target = $region45
    $region44: #{tpu_custom_call.1} parent=1 // pred_region
      %91 = dma.done [#allocation6], 1024
    $region45: #{tpu_custom_call.1} parent=1 // pred_fallthru
      _
    // Predicated region
    $region46: #{tpu_custom_call.1} parent=1 // pred_check
      _
    $region47: #{tpu_custom_call.1} parent=1 // pred_check_branch
      %93 = sbr.rel (0) target = $region49
    $region48: #{tpu_custom_call.1} parent=1 // pred_region
      %94 = dma.done [#allocation9], 1024
    $region49: #{tpu_custom_call.1} parent=1 // pred_fallthru
      _
    // Predicated region
    $region50: #{tpu_custom_call.1} parent=1 // pred_check
      _
    $region51: #{tpu_custom_call.1} parent=1 // pred_check_branch
      %96 = sbr.rel (0) target = $region53
    $region52: #{tpu_custom_call.1} parent=1 // pred_region
      %97 = dma.done [#allocation9], 2048
    $region53: #{tpu_custom_call.1} parent=1 // pred_fallthru
      _
    %v99 = vld [vmem:[#allocation2] sm:$0xf]
    %v100 = vld [vmem:[#allocation2 + $0x4] sm:$0xf]
    %v101 = vld [vmem:[#allocation2 + $0x8] sm:$0xf]
    %v102 = vld [vmem:[#allocation2 + $0xc] sm:$0xf]
    %v103 = vld [vmem:[#allocation2 + $0x10] sm:$0xf]
    %v104 = vld [vmem:[#allocation2 + $0x14] sm:$0xf]
    %v105 = vld [vmem:[#allocation2 + $0x18] sm:$0xf]
    %v106 = vld [vmem:[#allocation2 + $0x1c] sm:$0xf]
    %v107 = vld [vmem:[#allocation2 + $0x20] sm:$0xf]
    %v108 = vld [vmem:[#allocation2 + $0x24] sm:$0xf]
    %v109 = vld [vmem:[#allocation2 + $0x28] sm:$0xf]
    %v110 = vld [vmem:[#allocation2 + $0x2c] sm:$0xf]
    %v111 = vld [vmem:[#allocation2 + $0x30] sm:$0xf]
    %v112 = vld [vmem:[#allocation2 + $0x34] sm:$0xf]
    %v113 = vld [vmem:[#allocation2 + $0x38] sm:$0xf]
    %v114 = vld [vmem:[#allocation2 + $0x3c] sm:$0xf]
    %v115 = vld [vmem:[#allocation7] sm:$0xf]
    %v116 = vld [vmem:[#allocation7 + $0x4] sm:$0xf]
    %v117 = vld [vmem:[#allocation7 + $0x8] sm:$0xf]
    %v118 = vld [vmem:[#allocation7 + $0xc] sm:$0xf]
    %v119 = vld [vmem:[#allocation7 + $0x10] sm:$0xf]
    %v120 = vld [vmem:[#allocation7 + $0x14] sm:$0xf]
    %v121 = vld [vmem:[#allocation7 + $0x18] sm:$0xf]
    %v122 = vld [vmem:[#allocation7 + $0x1c] sm:$0xf]
    %v123 = vld [vmem:[#allocation7 + $0x20] sm:$0xf]
    %v124 = vld [vmem:[#allocation7 + $0x24] sm:$0xf]
    %v125 = vld [vmem:[#allocation7 + $0x28] sm:$0xf]
    %v126 = vld [vmem:[#allocation7 + $0x2c] sm:$0xf]
    %v127 = vld [vmem:[#allocation7 + $0x30] sm:$0xf]
    %v128 = vld [vmem:[#allocation7 + $0x34] sm:$0xf]
    %v129 = vld [vmem:[#allocation7 + $0x38] sm:$0xf]
    %v130 = vld [vmem:[#allocation7 + $0x3c] sm:$0xf]
    %v131 = vld [vmem:[%s3] sm:$0x1]
    %v133 = vlaneseq
    %v134 = vshrl.u32 %v133, 7
    %v135 = vsub.s32 0, %v134
    %v136 = vrot.slane %v131, %v135
    %v154 = vunpack.c.l.b16 %v99
    %v155 = vunpack.c.l.b16 %v100
    %v156 = vunpack.c.l.b16 %v101
    %v157 = vunpack.c.l.b16 %v102
    %v158 = vunpack.c.l.b16 %v103
    %v159 = vunpack.c.l.b16 %v104
    %v160 = vunpack.c.l.b16 %v105
    %v161 = vunpack.c.l.b16 %v106
    %v162 = vunpack.c.l.b16 %v107
    %v163 = vunpack.c.l.b16 %v108
    %v164 = vunpack.c.l.b16 %v109
    %v165 = vunpack.c.l.b16 %v110
    %v166 = vunpack.c.l.b16 %v111
    %v167 = vunpack.c.l.b16 %v112
    %v168 = vunpack.c.l.b16 %v113
    %v169 = vunpack.c.l.b16 %v114
    %v170 = vpack.c.b16 %v155, %v154
    %v171 = vpack.c.b16 %v157, %v156
    %v172 = vpack.c.b16 %v159, %v158
    %v173 = vpack.c.b16 %v161, %v160
    %v174 = vpack.c.b16 %v163, %v162
    %v175 = vpack.c.b16 %v165, %v164
    %v176 = vpack.c.b16 %v167, %v166
    %v177 = vpack.c.b16 %v169, %v168
    %v202 = vunpack.c.l.b16 %v115
    %v203 = vunpack.c.l.b16 %v116
    %v204 = vunpack.c.l.b16 %v117
    %v205 = vunpack.c.l.b16 %v118
    %v206 = vunpack.c.l.b16 %v119
    %v207 = vunpack.c.l.b16 %v120
    %v208 = vunpack.c.l.b16 %v121
    %v209 = vunpack.c.l.b16 %v122
    %v210 = vunpack.c.l.b16 %v123
    %v211 = vunpack.c.l.b16 %v124
    %v212 = vunpack.c.l.b16 %v125
    %v213 = vunpack.c.l.b16 %v126
    %v214 = vunpack.c.l.b16 %v127
    %v215 = vunpack.c.l.b16 %v128
    %v216 = vunpack.c.l.b16 %v129
    %v217 = vunpack.c.l.b16 %v130
    %v218 = vpack.c.b16 %v203, %v202
    %v219 = vpack.c.b16 %v205, %v204
    %v220 = vpack.c.b16 %v207, %v206
    %v221 = vpack.c.b16 %v209, %v208
    %v222 = vpack.c.b16 %v211, %v210
    %v223 = vpack.c.b16 %v213, %v212
    %v224 = vpack.c.b16 %v215, %v214
    %v225 = vpack.c.b16 %v217, %v216
    %234 = vmatprep.subr.bf16.mxu0 0
    %235 = vmatpush1.bf16.msra.mxu0 %v218
    %236 = vmatprep.subr.bf16.mxu0 0
    %237 = vmatpush1.bf16.msra.mxu0 %v219
    %238 = vmatprep.subr.bf16.mxu0 0
    %239 = vmatpush1.bf16.msra.mxu0 %v220
    %240 = vmatprep.subr.bf16.mxu0 0
    %241 = vmatpush1.bf16.msra.mxu0 %v221
    %242 = vmatprep.subr.bf16.mxu0 0
    %243 = vmatpush1.bf16.msra.mxu0 %v222
    %244 = vmatprep.subr.bf16.mxu0 0
    %245 = vmatpush1.bf16.msra.mxu0 %v223
    %246 = vmatprep.subr.bf16.mxu0 0
    %247 = vmatpush1.bf16.msra.mxu0 %v224
    %248 = vmatprep.subr.bf16.mxu0 0
    %249 = vmatpush1.bf16.msra.mxu0 %v225
    %250 = vmatprep.subr.bf16.mxu0 0
    %251 = vmatpush1.bf16.msra.mxu0 0
    %252 = vmatprep.subr.bf16.mxu0 0
    %253 = vmatpush1.bf16.msra.mxu0 0
    %254 = vmatprep.subr.bf16.mxu0 0
    %255 = vmatpush1.bf16.msra.mxu0 0
    %256 = vmatprep.subr.bf16.mxu0 0
    %257 = vmatpush1.bf16.msra.mxu0 0
    %258 = vmatprep.subr.bf16.mxu0 0
    %259 = vmatpush1.bf16.msra.mxu0 0
    %260 = vmatprep.subr.bf16.mxu0 0
    %261 = vmatpush1.bf16.msra.mxu0 0
    %262 = vmatprep.subr.bf16.mxu0 0
    %263 = vmatpush1.bf16.msra.mxu0 0
    %264 = vmatprep.subr.bf16.mxu0 0
    %265 = vmatpush1.bf16.msra.mxu0 0
    %266 = vmatprep.mubr.bf16.mxu0 0
    %267 = vmatmul.mubr.bf16.gmra.mrb[0].mxu0 %v170
    %v268 = vpop.f32.mrb[0].mxu0
    %v269 = vadd.f32 %v136, %v268
    %v270 = vpop.f32.mrb[0].mxu0
    %v271 = vpop.f32.mrb[0].mxu0
    %v272 = vadd.f32 %v136, %v271
    %v273 = vpop.f32.mrb[0].mxu0
    %274 = vmatprep.mubr.bf16.mxu0 0
    %275 = vmatmul.mubr.bf16.gmra.mrb[0].mxu0 %v171
    %v276 = vpop.f32.mrb[0].mxu0
    %v277 = vadd.f32 %v136, %v276
    %v278 = vpop.f32.mrb[0].mxu0
    %v279 = vpop.f32.mrb[0].mxu0
    %v280 = vadd.f32 %v136, %v279
    %v281 = vpop.f32.mrb[0].mxu0
    %282 = vmatprep.mubr.bf16.mxu0 0
    %283 = vmatmul.mubr.bf16.gmra.mrb[0].mxu0 %v172
    %v284 = vpop.f32.mrb[0].mxu0
    %v285 = vadd.f32 %v136, %v284
    %v286 = vpop.f32.mrb[0].mxu0
    %v287 = vpop.f32.mrb[0].mxu0
    %v288 = vadd.f32 %v136, %v287
    %v289 = vpop.f32.mrb[0].mxu0
    %290 = vmatprep.mubr.bf16.mxu0 0
    %291 = vmatmul.mubr.bf16.gmra.mrb[0].mxu0 %v173
    %v292 = vpop.f32.mrb[0].mxu0
    %v293 = vadd.f32 %v136, %v292
    %v294 = vpop.f32.mrb[0].mxu0
    %v295 = vpop.f32.mrb[0].mxu0
    %v296 = vadd.f32 %v136, %v295
    %v297 = vpop.f32.mrb[0].mxu0
    %298 = vmatprep.mubr.bf16.mxu0 0
    %299 = vmatmul.mubr.bf16.gmra.mrb[0].mxu0 %v174
    %v300 = vpop.f32.mrb[0].mxu0
    %v301 = vadd.f32 %v136, %v300
    %v302 = vpop.f32.mrb[0].mxu0
    %v303 = vpop.f32.mrb[0].mxu0
    %v304 = vadd.f32 %v136, %v303
    %v305 = vpop.f32.mrb[0].mxu0
    %306 = vmatprep.mubr.bf16.mxu0 0
    %307 = vmatmul.mubr.bf16.gmra.mrb[0].mxu0 %v175
    %v308 = vpop.f32.mrb[0].mxu0
    %v309 = vadd.f32 %v136, %v308
    %v310 = vpop.f32.mrb[0].mxu0
    %v311 = vpop.f32.mrb[0].mxu0
    %v312 = vadd.f32 %v136, %v311
    %v313 = vpop.f32.mrb[0].mxu0
    %314 = vmatprep.mubr.bf16.mxu0 0
    %315 = vmatmul.mubr.bf16.gmra.mrb[0].mxu0 %v176
    %v316 = vpop.f32.mrb[0].mxu0
    %v317 = vadd.f32 %v136, %v316
    %v318 = vpop.f32.mrb[0].mxu0
    %v319 = vpop.f32.mrb[0].mxu0
    %v320 = vadd.f32 %v136, %v319
    %v321 = vpop.f32.mrb[0].mxu0
    %322 = vmatprep.mubr.bf16.mxu0 0
    %323 = vmatmul.mubr.bf16.gmra.mrb[0].mxu0 %v177
    %v324 = vpop.f32.mrb[0].mxu0
    %v325 = vadd.f32 %v136, %v324
    %v326 = vpop.f32.mrb[0].mxu0
    %v327 = vpop.f32.mrb[0].mxu0
    %v328 = vadd.f32 %v136, %v327
    %v329 = vpop.f32.mrb[0].mxu0
    %330 = vdwg.mxu0
    %v331 = vmul.f32 %v269, 0.2
    %v332 = vmul.f32 %v272, 0.2
    %v333 = vmul.f32 %v277, 0.2
    %v334 = vmul.f32 %v280, 0.2
    %v335 = vmul.f32 %v285, 0.2
    %v336 = vmul.f32 %v288, 0.2
    %v337 = vmul.f32 %v293, 0.2
    %v338 = vmul.f32 %v296, 0.2
    %v339 = vmul.f32 %v301, 0.2
    %v340 = vmul.f32 %v304, 0.2
    %v341 = vmul.f32 %v309, 0.2
    %v342 = vmul.f32 %v312, 0.2
    %v343 = vmul.f32 %v317, 0.2
    %v344 = vmul.f32 %v320, 0.2
    %v345 = vmul.f32 %v325, 0.2
    %v346 = vmul.f32 %v328, 0.2
    %v347 = vmax.f32 %v269, %v331
    %v348 = vmax.f32 %v272, %v332
    %v349 = vmax.f32 %v277, %v333
    %v350 = vmax.f32 %v280, %v334
    %v351 = vmax.f32 %v285, %v335
    %v352 = vmax.f32 %v288, %v336
    %v353 = vmax.f32 %v293, %v337
    %v354 = vmax.f32 %v296, %v338
    %v355 = vmax.f32 %v301, %v339
    %v356 = vmax.f32 %v304, %v340
    %v357 = vmax.f32 %v309, %v341
    %v358 = vmax.f32 %v312, %v342
    %v359 = vmax.f32 %v317, %v343
    %v360 = vmax.f32 %v320, %v344
    %v361 = vmax.f32 %v325, %v345
    %v362 = vmax.f32 %v328, %v346
    %v363 = vpack.c.bf16 %v348, %v347
    %v364 = vpack.c.bf16 %v350, %v349
    %v365 = vpack.c.bf16 %v352, %v351
    %v366 = vpack.c.bf16 %v354, %v353
    %v367 = vpack.c.bf16 %v356, %v355
    %v368 = vpack.c.bf16 %v358, %v357
    %v369 = vpack.c.bf16 %v360, %v359
    %v370 = vpack.c.bf16 %v362, %v361
    %v371 = vld [vmem:[#allocation8] sm:$0xf]
    %v372 = vld [vmem:[#allocation8 + $0x4] sm:$0xf]
    %v373 = vld [vmem:[#allocation8 + $0x8] sm:$0xf]
    %v374 = vld [vmem:[#allocation8 + $0xc] sm:$0xf]
    %v375 = vld [vmem:[#allocation8 + $0x10] sm:$0xf]
    %v376 = vld [vmem:[#allocation8 + $0x14] sm:$0xf]
    %v377 = vld [vmem:[#allocation8 + $0x18] sm:$0xf]
    %v378 = vld [vmem:[#allocation8 + $0x1c] sm:$0xf]
    %v379 = vld [vmem:[#allocation8 + $0x20] sm:$0xf]
    %v380 = vld [vmem:[#allocation8 + $0x24] sm:$0xf]
    %v381 = vld [vmem:[#allocation8 + $0x28] sm:$0xf]
    %v382 = vld [vmem:[#allocation8 + $0x2c] sm:$0xf]
    %v383 = vld [vmem:[#allocation8 + $0x30] sm:$0xf]
    %v384 = vld [vmem:[#allocation8 + $0x34] sm:$0xf]
    %v385 = vld [vmem:[#allocation8 + $0x38] sm:$0xf]
    %v386 = vld [vmem:[#allocation8 + $0x3c] sm:$0xf]
    %v387 = vld [vmem:[%s5] sm:$0x1]
    %v389 = vlaneseq
    %v390 = vshrl.u32 %v389, 7
    %v391 = vsub.s32 0, %v390
    %v392 = vrot.slane %v387, %v391
    %v410 = vunpack.c.l.b16 %v371
    %v411 = vunpack.c.l.b16 %v372
    %v412 = vunpack.c.l.b16 %v373
    %v413 = vunpack.c.l.b16 %v374
    %v414 = vunpack.c.l.b16 %v375
    %v415 = vunpack.c.l.b16 %v376
    %v416 = vunpack.c.l.b16 %v377
    %v417 = vunpack.c.l.b16 %v378
    %v418 = vunpack.c.l.b16 %v379
    %v419 = vunpack.c.l.b16 %v380
    %v420 = vunpack.c.l.b16 %v381
    %v421 = vunpack.c.l.b16 %v382
    %v422 = vunpack.c.l.b16 %v383
    %v423 = vunpack.c.l.b16 %v384
    %v424 = vunpack.c.l.b16 %v385
    %v425 = vunpack.c.l.b16 %v386
    %v426 = vpack.c.b16 %v411, %v410
    %v427 = vpack.c.b16 %v413, %v412
    %v428 = vpack.c.b16 %v415, %v414
    %v429 = vpack.c.b16 %v417, %v416
    %v430 = vpack.c.b16 %v419, %v418
    %v431 = vpack.c.b16 %v421, %v420
    %v432 = vpack.c.b16 %v423, %v422
    %v433 = vpack.c.b16 %v425, %v424
    %442 = vmatprep.subr.bf16.mxu0 0
    %443 = vmatpush1.bf16.msra.mxu0 %v426
    %444 = vmatprep.subr.bf16.mxu0 0
    %445 = vmatpush1.bf16.msra.mxu0 %v427
    %446 = vmatprep.subr.bf16.mxu0 0
    %447 = vmatpush1.bf16.msra.mxu0 %v428
    %448 = vmatprep.subr.bf16.mxu0 0
    %449 = vmatpush1.bf16.msra.mxu0 %v429
    %450 = vmatprep.subr.bf16.mxu0 0
    %451 = vmatpush1.bf16.msra.mxu0 %v430
    %452 = vmatprep.subr.bf16.mxu0 0
    %453 = vmatpush1.bf16.msra.mxu0 %v431
    %454 = vmatprep.subr.bf16.mxu0 0
    %455 = vmatpush1.bf16.msra.mxu0 %v432
    %456 = vmatprep.subr.bf16.mxu0 0
    %457 = vmatpush1.bf16.msra.mxu0 %v433
    %458 = vmatprep.subr.bf16.mxu0 0
    %459 = vmatpush1.bf16.msra.mxu0 0
    %460 = vmatprep.subr.bf16.mxu0 0
    %461 = vmatpush1.bf16.msra.mxu0 0
    %462 = vmatprep.subr.bf16.mxu0 0
    %463 = vmatpush1.bf16.msra.mxu0 0
    %464 = vmatprep.subr.bf16.mxu0 0
    %465 = vmatpush1.bf16.msra.mxu0 0
    %466 = vmatprep.subr.bf16.mxu0 0
    %467 = vmatpush1.bf16.msra.mxu0 0
    %468 = vmatprep.subr.bf16.mxu0 0
    %469 = vmatpush1.bf16.msra.mxu0 0
    %470 = vmatprep.subr.bf16.mxu0 0
    %471 = vmatpush1.bf16.msra.mxu0 0
    %472 = vmatprep.subr.bf16.mxu0 0
    %473 = vmatpush1.bf16.msra.mxu0 0
    %474 = vmatprep.mubr.bf16.mxu0 0
    %475 = vmatmul.mubr.bf16.gmra.mrb[0].mxu0 %v363
    %v476 = vpop.f32.mrb[0].mxu0
    %v477 = vadd.f32 %v392, %v476
    %v478 = vpop.f32.mrb[0].mxu0
    %v479 = vpop.f32.mrb[0].mxu0
    %v480 = vadd.f32 %v392, %v479
    %v481 = vpop.f32.mrb[0].mxu0
    %482 = vmatprep.mubr.bf16.mxu0 0
    %483 = vmatmul.mubr.bf16.gmra.mrb[0].mxu0 %v364
    %v484 = vpop.f32.mrb[0].mxu0
    %v485 = vadd.f32 %v392, %v484
    %v486 = vpop.f32.mrb[0].mxu0
    %v487 = vpop.f32.mrb[0].mxu0
    %v488 = vadd.f32 %v392, %v487
    %v489 = vpop.f32.mrb[0].mxu0
    %490 = vmatprep.mubr.bf16.mxu0 0
    %491 = vmatmul.mubr.bf16.gmra.mrb[0].mxu0 %v365
    %v492 = vpop.f32.mrb[0].mxu0
    %v493 = vadd.f32 %v392, %v492
    %v494 = vpop.f32.mrb[0].mxu0
    %v495 = vpop.f32.mrb[0].mxu0
    %v496 = vadd.f32 %v392, %v495
    %v497 = vpop.f32.mrb[0].mxu0
    %498 = vmatprep.mubr.bf16.mxu0 0
    %499 = vmatmul.mubr.bf16.gmra.mrb[0].mxu0 %v366
    %v500 = vpop.f32.mrb[0].mxu0
    %v501 = vadd.f32 %v392, %v500
    %v502 = vpop.f32.mrb[0].mxu0
    %v503 = vpop.f32.mrb[0].mxu0
    %v504 = vadd.f32 %v392, %v503
    %v505 = vpop.f32.mrb[0].mxu0
    %506 = vmatprep.mubr.bf16.mxu0 0
    %507 = vmatmul.mubr.bf16.gmra.mrb[0].mxu0 %v367
    %v508 = vpop.f32.mrb[0].mxu0
    %v509 = vadd.f32 %v392, %v508
    %v510 = vpop.f32.mrb[0].mxu0
    %v511 = vpop.f32.mrb[0].mxu0
    %v512 = vadd.f32 %v392, %v511
    %v513 = vpop.f32.mrb[0].mxu0
    %514 = vmatprep.mubr.bf16.mxu0 0
    %515 = vmatmul.mubr.bf16.gmra.mrb[0].mxu0 %v368
    %v516 = vpop.f32.mrb[0].mxu0
    %v517 = vadd.f32 %v392, %v516
    %v518 = vpop.f32.mrb[0].mxu0
    %v519 = vpop.f32.mrb[0].mxu0
    %v520 = vadd.f32 %v392, %v519
    %v521 = vpop.f32.mrb[0].mxu0
    %522 = vmatprep.mubr.bf16.mxu0 0
    %523 = vmatmul.mubr.bf16.gmra.mrb[0].mxu0 %v369
    %v524 = vpop.f32.mrb[0].mxu0
    %v525 = vadd.f32 %v392, %v524
    %v526 = vpop.f32.mrb[0].mxu0
    %v527 = vpop.f32.mrb[0].mxu0
    %v528 = vadd.f32 %v392, %v527
    %v529 = vpop.f32.mrb[0].mxu0
    %530 = vmatprep.mubr.bf16.mxu0 0
    %531 = vmatmul.mubr.bf16.gmra.mrb[0].mxu0 %v370
    %v532 = vpop.f32.mrb[0].mxu0
    %v533 = vadd.f32 %v392, %v532
    %v534 = vpop.f32.mrb[0].mxu0
    %v535 = vpop.f32.mrb[0].mxu0
    %v536 = vadd.f32 %v392, %v535
    %v537 = vpop.f32.mrb[0].mxu0
    %538 = vdwg.mxu0
    %v539 = vmul.f32 %v477, 0.2
    %v540 = vmul.f32 %v480, 0.2
    %v541 = vmul.f32 %v485, 0.2
    %v542 = vmul.f32 %v488, 0.2
    %v543 = vmul.f32 %v493, 0.2
    %v544 = vmul.f32 %v496, 0.2
    %v545 = vmul.f32 %v501, 0.2
    %v546 = vmul.f32 %v504, 0.2
    %v547 = vmul.f32 %v509, 0.2
    %v548 = vmul.f32 %v512, 0.2
    %v549 = vmul.f32 %v517, 0.2
    %v550 = vmul.f32 %v520, 0.2
    %v551 = vmul.f32 %v525, 0.2
    %v552 = vmul.f32 %v528, 0.2
    %v553 = vmul.f32 %v533, 0.2
    %v554 = vmul.f32 %v536, 0.2
    %v555 = vmax.f32 %v477, %v539
    %v556 = vmax.f32 %v480, %v540
    %v557 = vmax.f32 %v485, %v541
    %v558 = vmax.f32 %v488, %v542
    %v559 = vmax.f32 %v493, %v543
    %v560 = vmax.f32 %v496, %v544
    %v561 = vmax.f32 %v501, %v545
    %v562 = vmax.f32 %v504, %v546
    %v563 = vmax.f32 %v509, %v547
    %v564 = vmax.f32 %v512, %v548
    %v565 = vmax.f32 %v517, %v549
    %v566 = vmax.f32 %v520, %v550
    %v567 = vmax.f32 %v525, %v551
    %v568 = vmax.f32 %v528, %v552
    %v569 = vmax.f32 %v533, %v553
    %v570 = vmax.f32 %v536, %v554
    %v571 = vpack.c.bf16 %v556, %v555
    %v572 = vpack.c.bf16 %v558, %v557
    %v573 = vpack.c.bf16 %v560, %v559
    %v574 = vpack.c.bf16 %v562, %v561
    %v575 = vpack.c.bf16 %v564, %v563
    %v576 = vpack.c.bf16 %v566, %v565
    %v577 = vpack.c.bf16 %v568, %v567
    %v578 = vpack.c.bf16 %v570, %v569
    %v579 = vld [vmem:[#allocation10] sm:$0xff]
    %v580 = vld [vmem:[#allocation10 + $0x8] sm:$0xff]
    %v581 = vld [vmem:[#allocation10 + $0x10] sm:$0xff]
    %v582 = vld [vmem:[#allocation10 + $0x18] sm:$0xff]
    %v583 = vld [vmem:[#allocation10 + $0x20] sm:$0xff]
    %v584 = vld [vmem:[#allocation10 + $0x28] sm:$0xff]
    %v585 = vld [vmem:[#allocation10 + $0x30] sm:$0xff]
    %v586 = vld [vmem:[#allocation10 + $0x38] sm:$0xff]
    %v587 = vld [vmem:[#allocation10 + $0x40] sm:$0xff]
    %v588 = vld [vmem:[#allocation10 + $0x48] sm:$0xff]
    %v589 = vld [vmem:[#allocation10 + $0x50] sm:$0xff]
    %v590 = vld [vmem:[#allocation10 + $0x58] sm:$0xff]
    %v591 = vld [vmem:[#allocation10 + $0x60] sm:$0xff]
    %v592 = vld [vmem:[#allocation10 + $0x68] sm:$0xff]
    %v593 = vld [vmem:[#allocation10 + $0x70] sm:$0xff]
    %v594 = vld [vmem:[#allocation10 + $0x78] sm:$0xff]
    %v595 = vld [vmem:[%s7] sm:$0x3]
    %v597 = vlaneseq
    %v598 = vshrl.u32 %v597, 7
    %v599 = vsub.s32 0, %v598
    %v600 = vrot.slane %v595, %v599
    %v601 = vlaneseq
    %v602 = vshrl.u32 %v601, 7
    %v603 = vsub.s32 1, %v602
    %v604 = vrot.slane %v595, %v603
    %v623 = vunpack.c.l.b16 %v579
    %v624 = vunpack.c.h.b16 %v579
    %v625 = vunpack.c.l.b16 %v580
    %v626 = vunpack.c.h.b16 %v580
    %v627 = vunpack.c.l.b16 %v581
    %v628 = vunpack.c.h.b16 %v581
    %v629 = vunpack.c.l.b16 %v582
    %v630 = vunpack.c.h.b16 %v582
    %v631 = vunpack.c.l.b16 %v583
    %v632 = vunpack.c.h.b16 %v583
    %v633 = vunpack.c.l.b16 %v584
    %v634 = vunpack.c.h.b16 %v584
    %v635 = vunpack.c.l.b16 %v585
    %v636 = vunpack.c.h.b16 %v585
    %v637 = vunpack.c.l.b16 %v586
    %v638 = vunpack.c.h.b16 %v586
    %v639 = vunpack.c.l.b16 %v587
    %v640 = vunpack.c.h.b16 %v587
    %v641 = vunpack.c.l.b16 %v588
    %v642 = vunpack.c.h.b16 %v588
    %v643 = vunpack.c.l.b16 %v589
    %v644 = vunpack.c.h.b16 %v589
    %v645 = vunpack.c.l.b16 %v590
    %v646 = vunpack.c.h.b16 %v590
    %v647 = vunpack.c.l.b16 %v591
    %v648 = vunpack.c.h.b16 %v591
    %v649 = vunpack.c.l.b16 %v592
    %v650 = vunpack.c.h.b16 %v592
    %v651 = vunpack.c.l.b16 %v593
    %v652 = vunpack.c.h.b16 %v593
    %v653 = vunpack.c.l.b16 %v594
    %v654 = vunpack.c.h.b16 %v594
    %v655 = vpack.c.b16 %v625, %v623
    %v656 = vpack.c.b16 %v626, %v624
    %v657 = vpack.c.b16 %v629, %v627
    %v658 = vpack.c.b16 %v630, %v628
    %v659 = vpack.c.b16 %v633, %v631
    %v660 = vpack.c.b16 %v634, %v632
    %v661 = vpack.c.b16 %v637, %v635
    %v662 = vpack.c.b16 %v638, %v636
    %v663 = vpack.c.b16 %v641, %v639
    %v664 = vpack.c.b16 %v642, %v640
    %v665 = vpack.c.b16 %v645, %v643
    %v666 = vpack.c.b16 %v646, %v644
    %v667 = vpack.c.b16 %v649, %v647
    %v668 = vpack.c.b16 %v650, %v648
    %v669 = vpack.c.b16 %v653, %v651
    %v670 = vpack.c.b16 %v654, %v652
    %687 = vmatprep.subr.bf16.mxu0 %v656
    %688 = vmatpush1.bf16.msra.mxu0 %v655
    %689 = vmatprep.subr.bf16.mxu0 %v658
    %690 = vmatpush1.bf16.msra.mxu0 %v657
    %691 = vmatprep.subr.bf16.mxu0 %v660
    %692 = vmatpush1.bf16.msra.mxu0 %v659
    %693 = vmatprep.subr.bf16.mxu0 %v662
    %694 = vmatpush1.bf16.msra.mxu0 %v661
    %695 = vmatprep.subr.bf16.mxu0 %v664
    %696 = vmatpush1.bf16.msra.mxu0 %v663
    %697 = vmatprep.subr.bf16.mxu0 %v666
    %698 = vmatpush1.bf16.msra.mxu0 %v665
    %699 = vmatprep.subr.bf16.mxu0 %v668
    %700 = vmatpush1.bf16.msra.mxu0 %v667
    %701 = vmatprep.subr.bf16.mxu0 %v670
    %702 = vmatpush1.bf16.msra.mxu0 %v669
    %703 = vmatprep.subr.bf16.mxu0 0
    %704 = vmatpush1.bf16.msra.mxu0 0
    %705 = vmatprep.subr.bf16.mxu0 0
    %706 = vmatpush1.bf16.msra.mxu0 0
    %707 = vmatprep.subr.bf16.mxu0 0
    %708 = vmatpush1.bf16.msra.mxu0 0
    %709 = vmatprep.subr.bf16.mxu0 0
    %710 = vmatpush1.bf16.msra.mxu0 0
    %711 = vmatprep.subr.bf16.mxu0 0
    %712 = vmatpush1.bf16.msra.mxu0 0
    %713 = vmatprep.subr.bf16.mxu0 0
    %714 = vmatpush1.bf16.msra.mxu0 0
    %715 = vmatprep.subr.bf16.mxu0 0
    %716 = vmatpush1.bf16.msra.mxu0 0
    %717 = vmatprep.subr.bf16.mxu0 0
    %718 = vmatpush1.bf16.msra.mxu0 0
    %719 = vmatprep.mubr.bf16.mxu0 0
    %720 = vmatmul.mubr.bf16.gmra.mrb[0].mxu0 %v571
    %v721 = vpop.f32.mrb[0].mxu0
    %v722 = vadd.f32 %v600, %v721
    %v723 = vpop.f32.mrb[0].mxu0
    %v724 = vadd.f32 %v604, %v723
    %v725 = vpop.f32.mrb[0].mxu0
    %v726 = vadd.f32 %v600, %v725
    %v727 = vpop.f32.mrb[0].mxu0
    %v728 = vadd.f32 %v604, %v727
    %729 = vmatprep.mubr.bf16.mxu0 0
    %730 = vmatmul.mubr.bf16.gmra.mrb[0].mxu0 %v572
    %v731 = vpop.f32.mrb[0].mxu0
    %v732 = vadd.f32 %v600, %v731
    %v733 = vpop.f32.mrb[0].mxu0
    %v734 = vadd.f32 %v604, %v733
    %v735 = vpop.f32.mrb[0].mxu0
    %v736 = vadd.f32 %v600, %v735
    %v737 = vpop.f32.mrb[0].mxu0
    %v738 = vadd.f32 %v604, %v737
    %739 = vmatprep.mubr.bf16.mxu0 0
    %740 = vmatmul.mubr.bf16.gmra.mrb[0].mxu0 %v573
    %v741 = vpop.f32.mrb[0].mxu0
    %v742 = vadd.f32 %v600, %v741
    %v743 = vpop.f32.mrb[0].mxu0
    %v744 = vadd.f32 %v604, %v743
    %v745 = vpop.f32.mrb[0].mxu0
    %v746 = vadd.f32 %v600, %v745
    %v747 = vpop.f32.mrb[0].mxu0
    %v748 = vadd.f32 %v604, %v747
    %749 = vmatprep.mubr.bf16.mxu0 0
    %750 = vmatmul.mubr.bf16.gmra.mrb[0].mxu0 %v574
    %v751 = vpop.f32.mrb[0].mxu0
    %v752 = vadd.f32 %v600, %v751
    %v753 = vpop.f32.mrb[0].mxu0
    %v754 = vadd.f32 %v604, %v753
    %v755 = vpop.f32.mrb[0].mxu0
    %v756 = vadd.f32 %v600, %v755
    %v757 = vpop.f32.mrb[0].mxu0
    %v758 = vadd.f32 %v604, %v757
    %759 = vmatprep.mubr.bf16.mxu0 0
    %760 = vmatmul.mubr.bf16.gmra.mrb[0].mxu0 %v575
    %v761 = vpop.f32.mrb[0].mxu0
    %v762 = vadd.f32 %v600, %v761
    %v763 = vpop.f32.mrb[0].mxu0
    %v764 = vadd.f32 %v604, %v763
    %v765 = vpop.f32.mrb[0].mxu0
    %v766 = vadd.f32 %v600, %v765
    %v767 = vpop.f32.mrb[0].mxu0
    %v768 = vadd.f32 %v604, %v767
    %769 = vmatprep.mubr.bf16.mxu0 0
    %770 = vmatmul.mubr.bf16.gmra.mrb[0].mxu0 %v576
    %v771 = vpop.f32.mrb[0].mxu0
    %v772 = vadd.f32 %v600, %v771
    %v773 = vpop.f32.mrb[0].mxu0
    %v774 = vadd.f32 %v604, %v773
    %v775 = vpop.f32.mrb[0].mxu0
    %v776 = vadd.f32 %v600, %v775
    %v777 = vpop.f32.mrb[0].mxu0
    %v778 = vadd.f32 %v604, %v777
    %779 = vmatprep.mubr.bf16.mxu0 0
    %780 = vmatmul.mubr.bf16.gmra.mrb[0].mxu0 %v577
    %v781 = vpop.f32.mrb[0].mxu0
    %v782 = vadd.f32 %v600, %v781
    %v783 = vpop.f32.mrb[0].mxu0
    %v784 = vadd.f32 %v604, %v783
    %v785 = vpop.f32.mrb[0].mxu0
    %v786 = vadd.f32 %v600, %v785
    %v787 = vpop.f32.mrb[0].mxu0
    %v788 = vadd.f32 %v604, %v787
    %789 = vmatprep.mubr.bf16.mxu0 0
    %790 = vmatmul.mubr.bf16.gmra.mrb[0].mxu0 %v578
    %v791 = vpop.f32.mrb[0].mxu0
    %v792 = vadd.f32 %v600, %v791
    %v793 = vpop.f32.mrb[0].mxu0
    %v794 = vadd.f32 %v604, %v793
    %v795 = vpop.f32.mrb[0].mxu0
    %v796 = vadd.f32 %v600, %v795
    %v797 = vpop.f32.mrb[0].mxu0
    %v798 = vadd.f32 %v604, %v797
    %799 = vdwg.mxu0
    %v800 = vmax.f32 %v724, 0.0
    %v801 = vmax.f32 %v728, 0.0
    %v802 = vmax.f32 %v734, 0.0
    %v803 = vmax.f32 %v738, 0.0
    %v804 = vmax.f32 %v744, 0.0
    %v805 = vmax.f32 %v748, 0.0
    %v806 = vmax.f32 %v754, 0.0
    %v807 = vmax.f32 %v758, 0.0
    %v808 = vmax.f32 %v764, 0.0
    %v809 = vmax.f32 %v768, 0.0
    %v810 = vmax.f32 %v774, 0.0
    %v811 = vmax.f32 %v778, 0.0
    %v812 = vmax.f32 %v784, 0.0
    %v813 = vmax.f32 %v788, 0.0
    %v814 = vmax.f32 %v794, 0.0
    %v815 = vmax.f32 %v798, 0.0
    %v816 = vand.u32 2147483647, %v724
    %v817 = vand.u32 2147483647, %v728
    %v818 = vand.u32 2147483647, %v734
    %v819 = vand.u32 2147483647, %v738
    %v820 = vand.u32 2147483647, %v744
    %v821 = vand.u32 2147483647, %v748
    %v822 = vand.u32 2147483647, %v754
    %v823 = vand.u32 2147483647, %v758
    %v824 = vand.u32 2147483647, %v764
    %v825 = vand.u32 2147483647, %v768
    %v826 = vand.u32 2147483647, %v774
    %v827 = vand.u32 2147483647, %v778
    %v828 = vand.u32 2147483647, %v784
    %v829 = vand.u32 2147483647, %v788
    %v830 = vand.u32 2147483647, %v794
    %v831 = vand.u32 2147483647, %v798
    %v832 = vsub.f32 0.0, %v816
    %v833 = vsub.f32 0.0, %v817
    %v834 = vsub.f32 0.0, %v818
    %v835 = vsub.f32 0.0, %v819
    %v836 = vsub.f32 0.0, %v820
    %v837 = vsub.f32 0.0, %v821
    %v838 = vsub.f32 0.0, %v822
    %v839 = vsub.f32 0.0, %v823
    %v840 = vsub.f32 0.0, %v824
    %v841 = vsub.f32 0.0, %v825
    %v842 = vsub.f32 0.0, %v826
    %v843 = vsub.f32 0.0, %v827
    %v844 = vsub.f32 0.0, %v828
    %v845 = vsub.f32 0.0, %v829
    %v846 = vsub.f32 0.0, %v830
    %v847 = vsub.f32 0.0, %v831
    %v848 = vmul.f32 %v832, 1.442695
    %v849 = vpow.pop %v848
    %v850 = vmul.f32 %v833, 1.442695
    %v851 = vpow.pop %v850
    %v852 = vmul.f32 %v834, 1.442695
    %v853 = vpow.pop %v852
    %v854 = vmul.f32 %v835, 1.442695
    %v855 = vpow.pop %v854
    %v856 = vmul.f32 %v836, 1.442695
    %v857 = vpow.pop %v856
    %v858 = vmul.f32 %v837, 1.442695
    %v859 = vpow.pop %v858
    %v860 = vmul.f32 %v838, 1.442695
    %v861 = vpow.pop %v860
    %v862 = vmul.f32 %v839, 1.442695
    %v863 = vpow.pop %v862
    %v864 = vmul.f32 %v840, 1.442695
    %v865 = vpow.pop %v864
    %v866 = vmul.f32 %v841, 1.442695
    %v867 = vpow.pop %v866
    %v868 = vmul.f32 %v842, 1.442695
    %v869 = vpow.pop %v868
    %v870 = vmul.f32 %v843, 1.442695
    %v871 = vpow.pop %v870
    %v872 = vmul.f32 %v844, 1.442695
    %v873 = vpow.pop %v872
    %v874 = vmul.f32 %v845, 1.442695
    %v875 = vpow.pop %v874
    %v876 = vmul.f32 %v846, 1.442695
    %v877 = vpow.pop %v876
    %v878 = vmul.f32 %v847, 1.442695
    %v879 = vpow.pop %v878
    %v880 = vadd.f32 %v849, 1.0
    %v881 = vlog2.pop %v880
    %v882 = vmul.f32 %v881, 0.6931472
    %v883 = vmul.f32 -0.5, %v849
    %v884 = vadd.f32 %v883, 1.0
    %v885 = vmul.f32 %v884, %v849
    %v886 = vand.u32 2147483647, %v849
    %vm887 = vcmp.lt.f32.partialorder %v886, 0.0004427343
    %v888 = vsel %vm887, %v885, %v882
    %v889 = vadd.f32 %v851, 1.0
    %v890 = vlog2.pop %v889
    %v891 = vmul.f32 %v890, 0.6931472
    %v892 = vmul.f32 -0.5, %v851
    %v893 = vadd.f32 %v892, 1.0
    %v894 = vmul.f32 %v893, %v851
    %v895 = vand.u32 2147483647, %v851
    %vm896 = vcmp.lt.f32.partialorder %v895, 0.0004427343
    %v897 = vsel %vm896, %v894, %v891
    %v898 = vadd.f32 %v853, 1.0
    %v899 = vlog2.pop %v898
    %v900 = vmul.f32 %v899, 0.6931472
    %v901 = vmul.f32 -0.5, %v853
    %v902 = vadd.f32 %v901, 1.0
    %v903 = vmul.f32 %v902, %v853
    %v904 = vand.u32 2147483647, %v853
    %vm905 = vcmp.lt.f32.partialorder %v904, 0.0004427343
    %v906 = vsel %vm905, %v903, %v900
    %v907 = vadd.f32 %v855, 1.0
    %v908 = vlog2.pop %v907
    %v909 = vmul.f32 %v908, 0.6931472
    %v910 = vmul.f32 -0.5, %v855
    %v911 = vadd.f32 %v910, 1.0
    %v912 = vmul.f32 %v911, %v855
    %v913 = vand.u32 2147483647, %v855
    %vm914 = vcmp.lt.f32.partialorder %v913, 0.0004427343
    %v915 = vsel %vm914, %v912, %v909
    %v916 = vadd.f32 %v857, 1.0
    %v917 = vlog2.pop %v916
    %v918 = vmul.f32 %v917, 0.6931472
    %v919 = vmul.f32 -0.5, %v857
    %v920 = vadd.f32 %v919, 1.0
    %v921 = vmul.f32 %v920, %v857
    %v922 = vand.u32 2147483647, %v857
    %vm923 = vcmp.lt.f32.partialorder %v922, 0.0004427343
    %v924 = vsel %vm923, %v921, %v918
    %v925 = vadd.f32 %v859, 1.0
    %v926 = vlog2.pop %v925
    %v927 = vmul.f32 %v926, 0.6931472
    %v928 = vmul.f32 -0.5, %v859
    %v929 = vadd.f32 %v928, 1.0
    %v930 = vmul.f32 %v929, %v859
    %v931 = vand.u32 2147483647, %v859
    %vm932 = vcmp.lt.f32.partialorder %v931, 0.0004427343
    %v933 = vsel %vm932, %v930, %v927
    %v934 = vadd.f32 %v861, 1.0
    %v935 = vlog2.pop %v934
    %v936 = vmul.f32 %v935, 0.6931472
    %v937 = vmul.f32 -0.5, %v861
    %v938 = vadd.f32 %v937, 1.0
    %v939 = vmul.f32 %v938, %v861
    %v940 = vand.u32 2147483647, %v861
    %vm941 = vcmp.lt.f32.partialorder %v940, 0.0004427343
    %v942 = vsel %vm941, %v939, %v936
    %v943 = vadd.f32 %v863, 1.0
    %v944 = vlog2.pop %v943
    %v945 = vmul.f32 %v944, 0.6931472
    %v946 = vmul.f32 -0.5, %v863
    %v947 = vadd.f32 %v946, 1.0
    %v948 = vmul.f32 %v947, %v863
    %v949 = vand.u32 2147483647, %v863
    %vm950 = vcmp.lt.f32.partialorder %v949, 0.0004427343
    %v951 = vsel %vm950, %v948, %v945
    %v952 = vadd.f32 %v865, 1.0
    %v953 = vlog2.pop %v952
    %v954 = vmul.f32 %v953, 0.6931472
    %v955 = vmul.f32 -0.5, %v865
    %v956 = vadd.f32 %v955, 1.0
    %v957 = vmul.f32 %v956, %v865
    %v958 = vand.u32 2147483647, %v865
    %vm959 = vcmp.lt.f32.partialorder %v958, 0.0004427343
    %v960 = vsel %vm959, %v957, %v954
    %v961 = vadd.f32 %v867, 1.0
    %v962 = vlog2.pop %v961
    %v963 = vmul.f32 %v962, 0.6931472
    %v964 = vmul.f32 -0.5, %v867
    %v965 = vadd.f32 %v964, 1.0
    %v966 = vmul.f32 %v965, %v867
    %v967 = vand.u32 2147483647, %v867
    %vm968 = vcmp.lt.f32.partialorder %v967, 0.0004427343
    %v969 = vsel %vm968, %v966, %v963
    %v970 = vadd.f32 %v869, 1.0
    %v971 = vlog2.pop %v970
    %v972 = vmul.f32 %v971, 0.6931472
    %v973 = vmul.f32 -0.5, %v869
    %v974 = vadd.f32 %v973, 1.0
    %v975 = vmul.f32 %v974, %v869
    %v976 = vand.u32 2147483647, %v869
    %vm977 = vcmp.lt.f32.partialorder %v976, 0.0004427343
    %v978 = vsel %vm977, %v975, %v972
    %v979 = vadd.f32 %v871, 1.0
    %v980 = vlog2.pop %v979
    %v981 = vmul.f32 %v980, 0.6931472
    %v982 = vmul.f32 -0.5, %v871
    %v983 = vadd.f32 %v982, 1.0
    %v984 = vmul.f32 %v983, %v871
    %v985 = vand.u32 2147483647, %v871
    %vm986 = vcmp.lt.f32.partialorder %v985, 0.0004427343
    %v987 = vsel %vm986, %v984, %v981
    %v988 = vadd.f32 %v873, 1.0
    %v989 = vlog2.pop %v988
    %v990 = vmul.f32 %v989, 0.6931472
    %v991 = vmul.f32 -0.5, %v873
    %v992 = vadd.f32 %v991, 1.0
    %v993 = vmul.f32 %v992, %v873
    %v994 = vand.u32 2147483647, %v873
    %vm995 = vcmp.lt.f32.partialorder %v994, 0.0004427343
    %v996 = vsel %vm995, %v993, %v990
    %v997 = vadd.f32 %v875, 1.0
    %v998 = vlog2.pop %v997
    %v999 = vmul.f32 %v998, 0.6931472
    %v1000 = vmul.f32 -0.5, %v875
    %v1001 = vadd.f32 %v1000, 1.0
    %v1002 = vmul.f32 %v1001, %v875
    %v1003 = vand.u32 2147483647, %v875
    %vm1004 = vcmp.lt.f32.partialorder %v1003, 0.0004427343
    %v1005 = vsel %vm1004, %v1002, %v999
    %v1006 = vadd.f32 %v877, 1.0
    %v1007 = vlog2.pop %v1006
    %v1008 = vmul.f32 %v1007, 0.6931472
    %v1009 = vmul.f32 -0.5, %v877
    %v1010 = vadd.f32 %v1009, 1.0
    %v1011 = vmul.f32 %v1010, %v877
    %v1012 = vand.u32 2147483647, %v877
    %vm1013 = vcmp.lt.f32.partialorder %v1012, 0.0004427343
    %v1014 = vsel %vm1013, %v1011, %v1008
    %v1015 = vadd.f32 %v879, 1.0
    %v1016 = vlog2.pop %v1015
    %v1017 = vmul.f32 %v1016, 0.6931472
    %v1018 = vmul.f32 -0.5, %v879
    %v1019 = vadd.f32 %v1018, 1.0
    %v1020 = vmul.f32 %v1019, %v879
    %v1021 = vand.u32 2147483647, %v879
    %vm1022 = vcmp.lt.f32.partialorder %v1021, 0.0004427343
    %v1023 = vsel %vm1022, %v1020, %v1017
    %v1024 = vadd.f32 %v800, %v888
    %v1025 = vadd.f32 %v801, %v897
    %v1026 = vadd.f32 %v802, %v906
    %v1027 = vadd.f32 %v803, %v915
    %v1028 = vadd.f32 %v804, %v924
    %v1029 = vadd.f32 %v805, %v933
    %v1030 = vadd.f32 %v806, %v942
    %v1031 = vadd.f32 %v807, %v951
    %v1032 = vadd.f32 %v808, %v960
    %v1033 = vadd.f32 %v809, %v969
    %v1034 = vadd.f32 %v810, %v978
    %v1035 = vadd.f32 %v811, %v987
    %v1036 = vadd.f32 %v812, %v996
    %v1037 = vadd.f32 %v813, %v1005
    %v1038 = vadd.f32 %v814, %v1014
    %v1039 = vadd.f32 %v815, %v1023
    %v1040 = vmax.f32 %v1024, 0.0001
    %v1041 = vmax.f32 %v1025, 0.0001
    %v1042 = vmax.f32 %v1026, 0.0001
    %v1043 = vmax.f32 %v1027, 0.0001
    %v1044 = vmax.f32 %v1028, 0.0001
    %v1045 = vmax.f32 %v1029, 0.0001
    %v1046 = vmax.f32 %v1030, 0.0001
    %v1047 = vmax.f32 %v1031, 0.0001
    %v1048 = vmax.f32 %v1032, 0.0001
    %v1049 = vmax.f32 %v1033, 0.0001
    %v1050 = vmax.f32 %v1034, 0.0001
    %v1051 = vmax.f32 %v1035, 0.0001
    %v1052 = vmax.f32 %v1036, 0.0001
    %v1053 = vmax.f32 %v1037, 0.0001
    %v1054 = vmax.f32 %v1038, 0.0001
    %v1055 = vmax.f32 %v1039, 0.0001
    %v1056 = vmin.f32 %v1040, 10.0
    %v1057 = vmin.f32 %v1041, 10.0
    %v1058 = vmin.f32 %v1042, 10.0
    %v1059 = vmin.f32 %v1043, 10.0
    %v1060 = vmin.f32 %v1044, 10.0
    %v1061 = vmin.f32 %v1045, 10.0
    %v1062 = vmin.f32 %v1046, 10.0
    %v1063 = vmin.f32 %v1047, 10.0
    %v1064 = vmin.f32 %v1048, 10.0
    %v1065 = vmin.f32 %v1049, 10.0
    %v1066 = vmin.f32 %v1050, 10.0
    %v1067 = vmin.f32 %v1051, 10.0
    %v1068 = vmin.f32 %v1052, 10.0
    %v1069 = vmin.f32 %v1053, 10.0
    %v1070 = vmin.f32 %v1054, 10.0
    %v1071 = vmin.f32 %v1055, 10.0
    %v1072 = vmul.f32 %v1056, 0.5
    %v1073 = vmul.f32 %v1057, 0.5
    %v1074 = vmul.f32 %v1058, 0.5
    %v1075 = vmul.f32 %v1059, 0.5
    %v1076 = vmul.f32 %v1060, 0.5
    %v1077 = vmul.f32 %v1061, 0.5
    %v1078 = vmul.f32 %v1062, 0.5
    %v1079 = vmul.f32 %v1063, 0.5
    %v1080 = vmul.f32 %v1064, 0.5
    %v1081 = vmul.f32 %v1065, 0.5
    %v1082 = vmul.f32 %v1066, 0.5
    %v1083 = vmul.f32 %v1067, 0.5
    %v1084 = vmul.f32 %v1068, 0.5
    %v1085 = vmul.f32 %v1069, 0.5
    %v1086 = vmul.f32 %v1070, 0.5
    %v1087 = vmul.f32 %v1071, 0.5
    %v1088 = vmul.f32 %v1072, 1.442695
    %v1089 = vpow.pop %v1088
    %v1090 = vmul.f32 %v1073, 1.442695
    %v1091 = vpow.pop %v1090
    %v1092 = vmul.f32 %v1074, 1.442695
    %v1093 = vpow.pop %v1092
    %v1094 = vmul.f32 %v1075, 1.442695
    %v1095 = vpow.pop %v1094
    %v1096 = vmul.f32 %v1076, 1.442695
    %v1097 = vpow.pop %v1096
    %v1098 = vmul.f32 %v1077, 1.442695
    %v1099 = vpow.pop %v1098
    %v1100 = vmul.f32 %v1078, 1.442695
    %v1101 = vpow.pop %v1100
    %v1102 = vmul.f32 %v1079, 1.442695
    %v1103 = vpow.pop %v1102
    %v1104 = vmul.f32 %v1080, 1.442695
    %v1105 = vpow.pop %v1104
    %v1106 = vmul.f32 %v1081, 1.442695
    %v1107 = vpow.pop %v1106
    %v1108 = vmul.f32 %v1082, 1.442695
    %v1109 = vpow.pop %v1108
    %v1110 = vmul.f32 %v1083, 1.442695
    %v1111 = vpow.pop %v1110
    %v1112 = vmul.f32 %v1084, 1.442695
    %v1113 = vpow.pop %v1112
    %v1114 = vmul.f32 %v1085, 1.442695
    %v1115 = vpow.pop %v1114
    %v1116 = vmul.f32 %v1086, 1.442695
    %v1117 = vpow.pop %v1116
    %v1118 = vmul.f32 %v1087, 1.442695
    %v1119 = vpow.pop %v1118
    %v1120 = vadd.f32 %v1089, 1e-06
    %v1121 = vadd.f32 %v1091, 1e-06
    %v1122 = vadd.f32 %v1093, 1e-06
    %v1123 = vadd.f32 %v1095, 1e-06
    %v1124 = vadd.f32 %v1097, 1e-06
    %v1125 = vadd.f32 %v1099, 1e-06
    %v1126 = vadd.f32 %v1101, 1e-06
    %v1127 = vadd.f32 %v1103, 1e-06
    %v1128 = vadd.f32 %v1105, 1e-06
    %v1129 = vadd.f32 %v1107, 1e-06
    %v1130 = vadd.f32 %v1109, 1e-06
    %v1131 = vadd.f32 %v1111, 1e-06
    %v1132 = vadd.f32 %v1113, 1e-06
    %v1133 = vadd.f32 %v1115, 1e-06
    %v1134 = vadd.f32 %v1117, 1e-06
    %v1135 = vadd.f32 %v1119, 1e-06
    %v1136 = vld [vmem:[#allocation5] sm:$0xff]
    %v1137 = vld [vmem:[#allocation5 + $0x8] sm:$0xff]
    %v1138 = vld [vmem:[#allocation5 + $0x10] sm:$0xff]
    %v1139 = vld [vmem:[#allocation5 + $0x18] sm:$0xff]
    %v1140 = vld [vmem:[#allocation5 + $0x20] sm:$0xff]
    %v1141 = vld [vmem:[#allocation5 + $0x28] sm:$0xff]
    %v1142 = vld [vmem:[#allocation5 + $0x30] sm:$0xff]
    %v1143 = vld [vmem:[#allocation5 + $0x38] sm:$0xff]
    %v1144 = vld [vmem:[#allocation5 + $0x40] sm:$0xff]
    %v1145 = vld [vmem:[#allocation5 + $0x48] sm:$0xff]
    %v1146 = vld [vmem:[#allocation5 + $0x50] sm:$0xff]
    %v1147 = vld [vmem:[#allocation5 + $0x58] sm:$0xff]
    %v1148 = vld [vmem:[#allocation5 + $0x60] sm:$0xff]
    %v1149 = vld [vmem:[#allocation5 + $0x68] sm:$0xff]
    %v1150 = vld [vmem:[#allocation5 + $0x70] sm:$0xff]
    %v1151 = vld [vmem:[#allocation5 + $0x78] sm:$0xff]
    %v1152 = vmul.f32 %v1136, %v1120
    %v1153 = vmul.f32 %v1137, %v1121
    %v1154 = vmul.f32 %v1138, %v1122
    %v1155 = vmul.f32 %v1139, %v1123
    %v1156 = vmul.f32 %v1140, %v1124
    %v1157 = vmul.f32 %v1141, %v1125
    %v1158 = vmul.f32 %v1142, %v1126
    %v1159 = vmul.f32 %v1143, %v1127
    %v1160 = vmul.f32 %v1144, %v1128
    %v1161 = vmul.f32 %v1145, %v1129
    %v1162 = vmul.f32 %v1146, %v1130
    %v1163 = vmul.f32 %v1147, %v1131
    %v1164 = vmul.f32 %v1148, %v1132
    %v1165 = vmul.f32 %v1149, %v1133
    %v1166 = vmul.f32 %v1150, %v1134
    %v1167 = vmul.f32 %v1151, %v1135
    %v1168 = vadd.f32 %v722, %v1152
    %v1169 = vadd.f32 %v726, %v1153
    %v1170 = vadd.f32 %v732, %v1154
    %v1171 = vadd.f32 %v736, %v1155
    %v1172 = vadd.f32 %v742, %v1156
    %v1173 = vadd.f32 %v746, %v1157
    %v1174 = vadd.f32 %v752, %v1158
    %v1175 = vadd.f32 %v756, %v1159
    %v1176 = vadd.f32 %v762, %v1160
    %v1177 = vadd.f32 %v766, %v1161
    %v1178 = vadd.f32 %v772, %v1162
    %v1179 = vadd.f32 %v776, %v1163
    %v1180 = vadd.f32 %v782, %v1164
    %v1181 = vadd.f32 %v786, %v1165
    %v1182 = vadd.f32 %v792, %v1166
    %v1183 = vadd.f32 %v796, %v1167
    %1184 = vst [vmem:[#allocation11] sm:$0xff] %v1168
    %1185 = vst [vmem:[#allocation11 + $0x18] sm:$0xff] %v1169
    %1186 = vst [vmem:[#allocation11 + $0x30] sm:$0xff] %v1170
    %1187 = vst [vmem:[#allocation11 + $0x48] sm:$0xff] %v1171
    %1188 = vst [vmem:[#allocation11 + $0x60] sm:$0xff] %v1172
    %1189 = vst [vmem:[#allocation11 + $0x78] sm:$0xff] %v1173
    %1190 = vst [vmem:[#allocation11 + $0x90] sm:$0xff] %v1174
    %1191 = vst [vmem:[#allocation11 + $0xa8] sm:$0xff] %v1175
    %1192 = vst [vmem:[#allocation11 + $0xc0] sm:$0xff] %v1176
    %1193 = vst [vmem:[#allocation11 + $0xd8] sm:$0xff] %v1177
    %1194 = vst [vmem:[#allocation11 + $0xf0] sm:$0xff] %v1178
    %1195 = vst [vmem:[#allocation11 + $0x108] sm:$0xff] %v1179
    %1196 = vst [vmem:[#allocation11 + $0x120] sm:$0xff] %v1180
    %1197 = vst [vmem:[#allocation11 + $0x138] sm:$0xff] %v1181
    %1198 = vst [vmem:[#allocation11 + $0x150] sm:$0xff] %v1182
    %1199 = vst [vmem:[#allocation11 + $0x168] sm:$0xff] %v1183
    %1200 = vst [vmem:[#allocation11 + $0x8] sm:$0xff] %v722
    %1201 = vst [vmem:[#allocation11 + $0x20] sm:$0xff] %v726
    %1202 = vst [vmem:[#allocation11 + $0x38] sm:$0xff] %v732
    %1203 = vst [vmem:[#allocation11 + $0x50] sm:$0xff] %v736
    %1204 = vst [vmem:[#allocation11 + $0x68] sm:$0xff] %v742
    %1205 = vst [vmem:[#allocation11 + $0x80] sm:$0xff] %v746
    %1206 = vst [vmem:[#allocation11 + $0x98] sm:$0xff] %v752
    %1207 = vst [vmem:[#allocation11 + $0xb0] sm:$0xff] %v756
    %1208 = vst [vmem:[#allocation11 + $0xc8] sm:$0xff] %v762
    %1209 = vst [vmem:[#allocation11 + $0xe0] sm:$0xff] %v766
    %1210 = vst [vmem:[#allocation11 + $0xf8] sm:$0xff] %v772
    %1211 = vst [vmem:[#allocation11 + $0x110] sm:$0xff] %v776
    %1212 = vst [vmem:[#allocation11 + $0x128] sm:$0xff] %v782
    %1213 = vst [vmem:[#allocation11 + $0x140] sm:$0xff] %v786
    %1214 = vst [vmem:[#allocation11 + $0x158] sm:$0xff] %v792
    %1215 = vst [vmem:[#allocation11 + $0x170] sm:$0xff] %v796
    %1216 = vst [vmem:[#allocation11 + $0x10] sm:$0xff] %v1056
    %1217 = vst [vmem:[#allocation11 + $0x28] sm:$0xff] %v1057
    %1218 = vst [vmem:[#allocation11 + $0x40] sm:$0xff] %v1058
    %1219 = vst [vmem:[#allocation11 + $0x58] sm:$0xff] %v1059
    %1220 = vst [vmem:[#allocation11 + $0x70] sm:$0xff] %v1060
    %1221 = vst [vmem:[#allocation11 + $0x88] sm:$0xff] %v1061
    %1222 = vst [vmem:[#allocation11 + $0xa0] sm:$0xff] %v1062
    %1223 = vst [vmem:[#allocation11 + $0xb8] sm:$0xff] %v1063
    %1224 = vst [vmem:[#allocation11 + $0xd0] sm:$0xff] %v1064
    %1225 = vst [vmem:[#allocation11 + $0xe8] sm:$0xff] %v1065
    %1226 = vst [vmem:[#allocation11 + $0x100] sm:$0xff] %v1066
    %1227 = vst [vmem:[#allocation11 + $0x118] sm:$0xff] %v1067
    %1228 = vst [vmem:[#allocation11 + $0x130] sm:$0xff] %v1068
    %1229 = vst [vmem:[#allocation11 + $0x148] sm:$0xff] %v1069
    %1230 = vst [vmem:[#allocation11 + $0x160] sm:$0xff] %v1070
    %1231 = vst [vmem:[#allocation11 + $0x178] sm:$0xff] %v1071
    // Predicated region
    $region54: #{tpu_custom_call.1} parent=1 // pred_check
      _
    $region55: #{tpu_custom_call.1} parent=1 // pred_check_branch
      %1233 = sbr.rel (0) target = $region57
    $region56: #{tpu_custom_call.1} parent=1 // pred_region
      %s1235 = ssub.s32 6144, 6144
      %1236 = vsyncadd [#allocation4], %s1235
      %s1237 = sshll.u32 [#allocation11], 4
      %s1238 = int_to_ptr.vmem [resolvable:$true] %s1237
      %1243 = dma.vmem_to_hbm [thread:$0]  %s1238, 6144, %s8, [#allocation4], 384, 384, 24
    $region57: #{tpu_custom_call.1} parent=1 // pred_fallthru
      _
    // Predicated region
    $region58: #{tpu_custom_call.1} parent=1 // pred_check
      _
    $region59: #{tpu_custom_call.1} parent=1 // pred_check_branch
      %1245 = sbr.rel (0) target = $region61
    $region60: #{tpu_custom_call.1} parent=1 // pred_region
      %1246 = dma.done [#allocation4], 6144
    $region61: #{tpu_custom_call.1} parent=1 // pred_fallthru
      _
    %1247 = vsyncpa [#allocation3], 1
    %1248 = vsyncpa [#allocation6], 1
    %1249 = vsyncpa [#allocation9], 1
    %1250 = vsyncpa [#allocation4], 1

</llo_original>
